<compile_context>
chip_gen: v7x
topology: tpu7x:2x2x1
jax: 0.10.0
libtpu: 0.0.40
codegen_flags: <defaults>
</compile_context>

<pallas_src>
import random

import jax
import jax.numpy as jnp
from jax.experimental import pallas as pl
from jax.experimental.pallas import tpu as pltpu

HIDDEN_UNITS = [32, 64, 128, 256]


def _round_up(x, m):
    return (x + m - 1) // m * m


# ------------------------- shared forward control flow ----------------------

def _forward_flow(arch, new_arch, env):
    """Replicates ModelOp_combine.forward exactly (same branch structure, same
    gate indexing, including duplicate indices in numP).

    `env` supplies the tensor algebra, so a single definition of the control
    flow drives (a) the static shape plan, (b) the in-kernel Pallas trace and
    (c) the pure-JAX reference.
    """
    # TODO(synk): F.dropout layers are identity here (inference mode); training-mode dropout is stochastic.
    tempP, numP, point, totalP = [], [], 0, 0
    tempT = []
    res = None
    n = len(arch)
    for i in range(n):
        if i == 0:
            res = env["pre"]()
            tempP.append(res); numP.append(i); totalP += 1
            res = env["op"](i, res)
            if arch[i] != 0:
                tempP.append(res); numP.append(i); totalP += 1
            else:
                tempT.append(res); numP, tempP = [], []
        elif arch[i - 1] != 0:
            if arch[i] == 0:
                res = env["gated"](tempP, numP, totalP)
                res = env["op"](i, res)
                tempT.append(res); numP, tempP = [], []
            else:
                res = env["op"](i, res)
                tempP.append(res); numP.append(i - point); totalP += 1
        elif arch[i] != 0:
            res = env["op"](i, res)
            tempP.append(res)
            point = i
            numP.append(i - point); totalP += 1
        else:
            # torch: concat(tempT, 1) -> freshly-created MLP -> self._ops[i]
            res = env["tmlp"](i, tempT, new_arch[i - 1])
            res = env["op"](i, res)
            tempT.append(res)
    if len(numP) > 0 or len(tempP) > 0:
        res = env["gated"](tempP, numP, totalP)
    else:
        res = env["tmlp"](n, tempT, new_arch[n - 1])
    res = env["classifier"](res)
    return env["log_softmax"](res)


# ------------------------------- model build ---------------------------------

def _init_linear(key, fan_in, fan_out):
    kw, kb = jax.random.split(key)
    bound = 1.0 / (fan_in ** 0.5)
    w = jax.random.uniform(kw, (fan_in, fan_out), jnp.float32, -bound, bound)
    b = jax.random.uniform(kb, (1, fan_out), jnp.float32, -bound, bound)
    return w, b


def build_model(key, arch, feat_dim, hid_dim, num_classes):
    """Mirrors ModelOp_combine.__init__ plus a static shape-plan of forward()."""
    k_ops, k_gate, k_pre, k_cls, k_tmlp = jax.random.split(key, 5)
    op_keys = jax.random.split(k_ops, len(arch))

    ops_meta, new_arch = [], []
    input_dim, num_p = hid_dim, 1
    for i, element in enumerate(arch):
        if element == 0:
            out_dim = HIDDEN_UNITS[random.randint(0, 3)]     # torch: random.randint(0, 3)
            w, b = _init_linear(op_keys[i], input_dim, out_dim)
            ops_meta.append(dict(type="mlp", w=w, b=b, out_dim=out_dim))
            input_dim = out_dim
            new_arch.append(input_dim)
        else:
            # element: 1->adj_nor, 2->adj_com, 3->adj_sing, 4->adj_row, else->adj_col
            adj_idx = {1: 0, 2: 1, 3: 2, 4: 3}.get(element, 4)
            ops_meta.append(dict(type="graph", adj_idx=adj_idx))
            num_p += 1
            new_arch.append(element)

    params = dict(gate=1e-5 * jax.random.normal(k_gate, (num_p,), jnp.float32))
    params["pre_w"], params["pre_b"] = _init_linear(k_pre, feat_dim, hid_dim)
    params["cls_w"], params["cls_b"] = _init_linear(k_cls, input_dim, num_classes)

    # Shape-only pass: discovers the (in, out) dims of every tMLP that torch
    # would instantiate inside forward().
    tmlp_specs = {}

    def _shape_op(i, d):
        m = ops_meta[i]
        return d if m["type"] == "graph" else m["out_dim"]

    def _shape_tmlp(key_, temp_t, out_dim):
        tmlp_specs[key_] = (sum(temp_t), out_dim)
        return out_dim

    shape_env = dict(
        pre=lambda: hid_dim,
        op=_shape_op,
        gated=lambda temp_p, num_list, total_p: temp_p[num_list[0]],
        tmlp=_shape_tmlp,
        classifier=lambda d: num_classes,
        log_softmax=lambda d: d,
    )
    _forward_flow(arch, new_arch, shape_env)

    # TODO(synk): torch re-initializes these forward-time tMLPs with fresh random weights every call; here they are materialized once, deterministically.
    tmlp_keys = jax.random.split(k_tmlp, max(len(tmlp_specs), 1))
    tmlp_params = {
        k: _init_linear(tmlp_keys[n], in_d, out_d)
        for n, (k, (in_d, out_d)) in enumerate(sorted(tmlp_specs.items()))
    }

    meta = dict(new_arch=tuple(new_arch), input_dim=input_dim)
    return params, ops_meta, meta, tmlp_params


# --------------------- host-side static plan + operand packing ---------------

def plan_and_pack(params, ops_meta, tmlp_params, adjs):
    """Static packing plan + packed device operands (host side, concrete data).

    * Only adjacency variants actually referenced by ops_meta are stacked into
      one [n_used, N, N] operand; identity adjacencies are elided entirely.
    * All weights / biases / the raw gate vector go into ONE f32 slab [R, W];
      every block starts at a multiple-of-8 row offset and column 0, so the
      in-kernel slices are aligned and free.
    """
    n_nodes = adjs[0].shape[0]
    eye = jnp.eye(n_nodes, dtype=jnp.float32)

    used, used_order, graph_plan = {}, [], {}
    for i, m in enumerate(ops_meta):
        if m["type"] != "graph":
            continue
        k = m["adj_idx"]
        if bool(jnp.array_equal(adjs[k].astype(jnp.float32), eye)):
            graph_plan[i] = ("identity", 0)      # adj == I -> elide the matmul
        else:
            if k not in used:
                used[k] = len(used)
                used_order.append(k)
            graph_plan[i] = ("adj", used[k])
    if used_order:
        adj_stack = jnp.stack([adjs[k].astype(jnp.float32) for k in used_order])
    else:
        adj_stack = jnp.zeros((1, n_nodes, n_nodes), jnp.float32)

    num_p = params["gate"].shape[0]
    entries = [("gate", params["gate"].reshape(1, num_p)),
               ("pre_w", params["pre_w"]), ("pre_b", params["pre_b"])]
    for i, m in enumerate(ops_meta):
        if m["type"] == "mlp":
            entries.append((("op_w", i), m["w"]))
            entries.append((("op_b", i), m["b"]))
    for key_ in sorted(tmlp_params):
        w, b = tmlp_params[key_]
        entries.append((("tmlp_w", key_), w))
        entries.append((("tmlp_b", key_), b))
    entries.append(("cls_w", params["cls_w"]))
    entries.append(("cls_b", params["cls_b"]))

    slab_w = _round_up(max(int(a.shape[1]) for _, a in entries), 128)
    offsets, shapes, blocks, row = {}, {}, [], 0
    for name, a in entries:
        r, c = int(a.shape[0]), int(a.shape[1])
        rp = _round_up(r, 8)
        offsets[name] = row
        shapes[name] = (r, c)
        blk = jnp.zeros((rp, slab_w), jnp.float32).at[:r, :c].set(a.astype(jnp.float32))
        blocks.append(blk)
        row += rp
    slab = jnp.concatenate(blocks, axis=0)

    plan = dict(offsets=offsets, shapes=shapes, graph_plan=graph_plan,
                op_types=tuple(m["type"] for m in ops_meta))
    return plan, adj_stack, slab


# --------------------------- fused Pallas forward ----------------------------

def make_fused_forward(arch, new_arch, plan, n_nodes, num_classes):
    """Returns a jitted fn (s0, adj_stack, slab) -> log_softmax logits, one
    ungridded pallas_call with 3 input DMAs."""
    offsets, shapes = plan["offsets"], plan["shapes"]
    graph_plan, op_types = plan["graph_plan"], plan["op_types"]

    def kernel(s0_ref, adj_ref, slab_ref, out_ref):
        def slab_mat(name):
            off = offsets[name]
            r, c = shapes[name]
            return slab_ref[pl.ds(off, r), pl.ds(0, c)]

        # sigmoid(gate) computed once inside the kernel (EUP); raw gate lives
        # in the slab, so no separate XLA op / operand.
        gate_raw = slab_mat("gate")                       # (1, num_p)
        gate_sig = 1.0 / (1.0 + jnp.exp(-gate_raw))

        def mlp(x, w_name, b_name, last):
            y = jnp.dot(x, slab_mat(w_name),
                        preferred_element_type=jnp.float32) + slab_mat(b_name)
            return y if last else jnp.maximum(y, 0.0)

        def env_op(i, x):
            if op_types[i] == "graph":
                kind, slot = graph_plan[i]
                if kind == "identity":
                    return x
                return jnp.dot(adj_ref[slot], x, preferred_element_type=jnp.float32)
            return mlp(x, ("op_w", i), ("op_b", i), last=False)

        def env_gated(temp_p, num_list, total_p):
            # sum_j sigmoid(gate[totalP - len + j]) * tempP[j], accumulated
            # in-register; gate scalar is a static (1,1) slice broadcast.
            acc = None
            base = total_p - len(num_list)
            for j in num_list:
                g = gate_sig[0:1, base + j:base + j + 1]
                term = g * temp_p[j]
                acc = term if acc is None else acc + term
            return acc

        def env_tmlp(key_, temp_t, out_dim):
            # Segmented matmul against static row-slices of the tMLP weight:
            # avoids the lane-axis concat (and its VMEM relayout) entirely.
            w_off = offsets[("tmlp_w", key_)]
            _, out_c = shapes[("tmlp_w", key_)]
            acc, row = None, 0
            for t in temp_t:
                seg = t.shape[1]
                w_seg = slab_ref[pl.ds(w_off + row, seg), pl.ds(0, out_c)]
                part = jnp.dot(t, w_seg, preferred_element_type=jnp.float32)
                acc = part if acc is None else acc + part
                row += seg
            return jnp.maximum(acc + slab_mat(("tmlp_b", key_)), 0.0)

        def env_log_softmax(x):
            m = jnp.max(x, axis=1, keepdims=True)
            s = x - m
            lse = jnp.log(jnp.sum(jnp.exp(s), axis=1, keepdims=True))
            return s - lse

        env = dict(
            pre=lambda: mlp(s0_ref[...], "pre_w", "pre_b", last=True),
            op=env_op,
            gated=env_gated,
            tmlp=env_tmlp,
            classifier=lambda x: mlp(x, "cls_w", "cls_b", last=True),
            log_softmax=env_log_softmax,
        )
        out_ref[...] = _forward_flow(arch, new_arch, env).astype(out_ref.dtype)

    def fwd(s0, adj_stack, slab):
        operand_bytes = 4 * (s0.size + adj_stack.size + slab.size
                             + n_nodes * num_classes)
        # Headroom over the 16 MiB (v5e) / 32 MiB (v6e/v7x) default scoped
        # limits; capped well below v7x's 64 MiB physical VMEM.
        vmem_limit = int(min(max(4 * operand_bytes + (4 << 20), 16 << 20), 48 << 20))
        return pl.pallas_call(
            kernel,
            out_shape=jax.ShapeDtypeStruct((n_nodes, num_classes), jnp.float32),
            in_specs=[pl.BlockSpec(memory_space=pltpu.MemorySpace.VMEM)] * 3,
            out_specs=pl.BlockSpec(memory_space=pltpu.MemorySpace.VMEM),
            compiler_params=pltpu.CompilerParams(vmem_limit_bytes=vmem_limit),
        )(s0, adj_stack, slab)

    return jax.jit(fwd)


# --------------------------- pure-JAX reference -------------------------------

def reference_forward(s0, adjs, params, ops_meta, tmlp_params, arch, new_arch):
    gate_sig = jax.nn.sigmoid(params["gate"])

    def mlp(x, w, b, last):
        y = x @ w + b
        return y if last else jnp.maximum(y, 0.0)

    env = dict(
        pre=lambda: mlp(s0, params["pre_w"], params["pre_b"], True),
        op=lambda i, x: (adjs[ops_meta[i]["adj_idx"]] @ x
                         if ops_meta[i]["type"] == "graph"
                         else mlp(x, ops_meta[i]["w"], ops_meta[i]["b"], False)),
        gated=lambda temp_p, num_list, total_p: sum(
            gate_sig[total_p - len(num_list) + j] * temp_p[j] for j in num_list),
        tmlp=lambda key_, temp_t, out_dim: mlp(
            temp_t[0] if len(temp_t) == 1 else jnp.concatenate(temp_t, axis=1),
            tmlp_params[key_][0], tmlp_params[key_][1], False),
        classifier=lambda x: mlp(x, params["cls_w"], params["cls_b"], True),
        log_softmax=lambda x: jax.nn.log_softmax(x, axis=1),
    )
    return _forward_flow(arch, new_arch, env)


# ------------------------------------ main ------------------------------------

if __name__ == "__main__":
    N_NODES, FEAT, HID, CLASSES = 64, 64, 128, 8
    # arch values: 0 = MLP op (random width from HIDDEN_UNITS); 1..5 = Graph op
    # selecting adj_nor / adj_com / adj_sing / adj_row / adj_col respectively.
    arch = [1, 0, 0, 2, 5]      # graph ops, MLP ops, gated sums and the tMLP branch

    random.seed(0)              # deterministic hidden-unit choice for each MLP op
    key = jax.random.PRNGKey(0)
    k_adj, k_model, k_x = jax.random.split(key, 3)

    # Deterministic synthetic adjacency variants (normalized random graph).
    A = (jax.random.uniform(k_adj, (N_NODES, N_NODES)) < 0.1).astype(jnp.float32)
    A = jnp.maximum(A, A.T) + jnp.eye(N_NODES, dtype=jnp.float32)
    deg = A.sum(axis=1)
    adj_nor = A / jnp.sqrt(deg)[:, None] / jnp.sqrt(deg)[None, :]
    adj_com = A / A.sum()
    adj_sing = jnp.eye(N_NODES, dtype=jnp.float32)
    adj_row = A / deg[:, None]
    adj_col = A / deg[None, :]
    adjs = (adj_nor, adj_com, adj_sing, adj_row, adj_col)

    params, ops_meta, meta, tmlp_params = build_model(k_model, arch, FEAT, HID, CLASSES)
    s0 = jax.random.normal(k_x, (N_NODES, FEAT), jnp.float32)

    plan, adj_stack, slab = plan_and_pack(params, ops_meta, tmlp_params, adjs)
    fwd = make_fused_forward(tuple(arch), meta["new_arch"], plan, N_NODES, CLASSES)

    logits = jax.block_until_ready(fwd(s0, adj_stack, slab))

    ref = reference_forward(s0, adjs, params, ops_meta, tmlp_params,
                            tuple(arch), meta["new_arch"])

    assert logits.shape == (N_NODES, CLASSES)
    assert bool(jnp.all(jnp.isfinite(logits)))
    # rows of log_softmax must exp-sum to 1
    assert bool(jnp.allclose(jnp.exp(logits).sum(axis=1), 1.0, atol=1e-5))
    # Match the pure-JAX reference (loose tolerance: MXU default f32 matmul
    # precision inside the kernel may differ slightly from XLA's default).
    assert bool(jnp.allclose(logits, ref, atol=5e-2, rtol=5e-2))
    print("KERNEL_OK")
</pallas_src>

<mosaic_0001>
module attributes {stable_mosaic.version = 11 : i64} {
  func.func @kernel(%arg0: memref<64x64xf32, #tpu.memory_space<vmem>>, %arg1: memref<3x64x64xf32, #tpu.memory_space<vmem>>, %arg2: memref<1008x256xf32, #tpu.memory_space<vmem>>, %arg3: memref<64x8xf32, #tpu.memory_space<vmem>>) attributes {dimension_semantics = [], scalar_prefetch = 0 : i64, scratch_operands = 0 : i64, tpu.core_type = #tpu.core_type<tc>} {
    %c0 = arith.constant 0 : index
    %c0_0 = arith.constant 0 : index
    %0 = vector.load %arg2[%c0, %c0_0] : memref<1008x256xf32, #tpu.memory_space<vmem>>, vector<1x4xf32>
    %cst = arith.constant 0.000000e+00 : f32
    %1 = vector.broadcast %cst : f32 to vector<1x4xf32>
    %2 = arith.subf %1, %0 : vector<1x4xf32>
    %3 = math.exp %2 : vector<1x4xf32>
    %cst_1 = arith.constant 1.000000e+00 : f32
    %4 = vector.broadcast %cst_1 : f32 to vector<1x4xf32>
    %5 = arith.addf %4, %3 : vector<1x4xf32>
    %cst_2 = arith.constant 1.000000e+00 : f32
    %6 = vector.broadcast %cst_2 : f32 to vector<1x4xf32>
    %7 = arith.divf %6, %5 : vector<1x4xf32>
    %c0_3 = arith.constant 0 : index
    %c0_4 = arith.constant 0 : index
    %8 = vector.load %arg0[%c0_3, %c0_4] : memref<64x64xf32, #tpu.memory_space<vmem>>, vector<64x64xf32>
    %c8 = arith.constant 8 : index
    %c0_5 = arith.constant 0 : index
    %9 = vector.load %arg2[%c8, %c0_5] : memref<1008x256xf32, #tpu.memory_space<vmem>>, vector<64x128xf32>
    %cst_6 = arith.constant dense<0.000000e+00> : vector<64x128xf32>
    %10 = tpu.matmul %8, %9, %cst_6 {dimension_numbers = #tpu.dot_dimension_numbers<[1], [0], [0], [1], [0, 0, 1, 1], [], []>} : vector<64x64xf32>, vector<64x128xf32>, vector<64x128xf32> -> vector<64x128xf32>
    %c72 = arith.constant 72 : index
    %c0_7 = arith.constant 0 : index
    %11 = vector.load %arg2[%c72, %c0_7] : memref<1008x256xf32, #tpu.memory_space<vmem>>, vector<1x128xf32>
    %12 = vector.broadcast %11 : vector<1x128xf32> to vector<64x128xf32>
    %13 = arith.addf %10, %12 : vector<64x128xf32>
    %14 = vector.extract_strided_slice %7 {offsets = [0, 0], sizes = [1, 1], strides = [1, 1]} : vector<1x4xf32> to vector<1x1xf32>
    %15 = vector.broadcast %14 : vector<1x1xf32> to vector<64x128xf32>
    %16 = arith.mulf %15, %13 : vector<64x128xf32>
    %17 = vector.extract_strided_slice %7 {offsets = [0, 0], sizes = [1, 1], strides = [1, 1]} : vector<1x4xf32> to vector<1x1xf32>
    %18 = vector.broadcast %17 : vector<1x1xf32> to vector<64x128xf32>
    %19 = arith.mulf %18, %13 : vector<64x128xf32>
    %20 = arith.addf %16, %19 : vector<64x128xf32>
    %c80 = arith.constant 80 : index
    %c0_8 = arith.constant 0 : index
    %21 = vector.load %arg2[%c80, %c0_8] : memref<1008x256xf32, #tpu.memory_space<vmem>>, vector<128x256xf32>
    %cst_9 = arith.constant dense<0.000000e+00> : vector<64x256xf32>
    %22 = tpu.matmul %20, %21, %cst_9 {dimension_numbers = #tpu.dot_dimension_numbers<[1], [0], [0], [1], [0, 0, 1, 1], [], []>} : vector<64x128xf32>, vector<128x256xf32>, vector<64x256xf32> -> vector<64x256xf32>
    %c208 = arith.constant 208 : index
    %c0_10 = arith.constant 0 : index
    %23 = vector.load %arg2[%c208, %c0_10] : memref<1008x256xf32, #tpu.memory_space<vmem>>, vector<1x256xf32>
    %24 = vector.broadcast %23 : vector<1x256xf32> to vector<64x256xf32>
    %25 = arith.addf %22, %24 : vector<64x256xf32>
    %cst_11 = arith.constant 0.000000e+00 : f32
    %26 = vector.broadcast %cst_11 : f32 to vector<64x256xf32>
    %27 = arith.maximumf %25, %26 : vector<64x256xf32>
    %c480 = arith.constant 480 : index
    %c0_12 = arith.constant 0 : index
    %28 = vector.load %arg2[%c480, %c0_12] : memref<1008x256xf32, #tpu.memory_space<vmem>>, vector<256x256xf32>
    %cst_13 = arith.constant dense<0.000000e+00> : vector<64x256xf32>
    %29 = tpu.matmul %27, %28, %cst_13 {dimension_numbers = #tpu.dot_dimension_numbers<[1], [0], [0], [1], [0, 0, 1, 1], [], []>} : vector<64x256xf32>, vector<256x256xf32>, vector<64x256xf32> -> vector<64x256xf32>
    %c736 = arith.constant 736 : index
    %c0_14 = arith.constant 0 : index
    %30 = vector.load %arg2[%c736, %c0_14] : memref<1008x256xf32, #tpu.memory_space<vmem>>, vector<1x256xf32>
    %31 = vector.broadcast %30 : vector<1x256xf32> to vector<64x256xf32>
    %32 = arith.addf %29, %31 : vector<64x256xf32>
    %cst_15 = arith.constant 0.000000e+00 : f32
    %33 = vector.broadcast %cst_15 : f32 to vector<64x256xf32>
    %34 = arith.maximumf %32, %33 : vector<64x256xf32>
    %c216 = arith.constant 216 : index
    %c0_16 = arith.constant 0 : index
    %35 = vector.load %arg2[%c216, %c0_16] : memref<1008x256xf32, #tpu.memory_space<vmem>>, vector<256x256xf32>
    %cst_17 = arith.constant dense<0.000000e+00> : vector<64x256xf32>
    %36 = tpu.matmul %34, %35, %cst_17 {dimension_numbers = #tpu.dot_dimension_numbers<[1], [0], [0], [1], [0, 0, 1, 1], [], []>} : vector<64x256xf32>, vector<256x256xf32>, vector<64x256xf32> -> vector<64x256xf32>
    %c472 = arith.constant 472 : index
    %c0_18 = arith.constant 0 : index
    %37 = vector.load %arg2[%c472, %c0_18] : memref<1008x256xf32, #tpu.memory_space<vmem>>, vector<1x256xf32>
    %38 = vector.broadcast %37 : vector<1x256xf32> to vector<64x256xf32>
    %39 = arith.addf %36, %38 : vector<64x256xf32>
    %cst_19 = arith.constant 0.000000e+00 : f32
    %40 = vector.broadcast %cst_19 : f32 to vector<64x256xf32>
    %41 = arith.maximumf %39, %40 : vector<64x256xf32>
    %c1 = arith.constant 1 : index
    %c0_20 = arith.constant 0 : index
    %c0_21 = arith.constant 0 : index
    %42 = vector.load %arg1[%c1, %c0_20, %c0_21] : memref<3x64x64xf32, #tpu.memory_space<vmem>>, vector<1x64x64xf32>
    %43 = vector.shape_cast %42 : vector<1x64x64xf32> to vector<64x64xf32>
    %cst_22 = arith.constant dense<0.000000e+00> : vector<64x256xf32>
    %44 = tpu.matmul %43, %41, %cst_22 {dimension_numbers = #tpu.dot_dimension_numbers<[1], [0], [0], [1], [0, 0, 1, 1], [], []>} : vector<64x64xf32>, vector<64x256xf32>, vector<64x256xf32> -> vector<64x256xf32>
    %c2 = arith.constant 2 : index
    %c0_23 = arith.constant 0 : index
    %c0_24 = arith.constant 0 : index
    %45 = vector.load %arg1[%c2, %c0_23, %c0_24] : memref<3x64x64xf32, #tpu.memory_space<vmem>>, vector<1x64x64xf32>
    %46 = vector.shape_cast %45 : vector<1x64x64xf32> to vector<64x64xf32>
    %cst_25 = arith.constant dense<0.000000e+00> : vector<64x256xf32>
    %47 = tpu.matmul %46, %44, %cst_25 {dimension_numbers = #tpu.dot_dimension_numbers<[1], [0], [0], [1], [0, 0, 1, 1], [], []>} : vector<64x64xf32>, vector<64x256xf32>, vector<64x256xf32> -> vector<64x256xf32>
    %48 = vector.extract_strided_slice %7 {offsets = [0, 2], sizes = [1, 1], strides = [1, 1]} : vector<1x4xf32> to vector<1x1xf32>
    %49 = vector.broadcast %48 : vector<1x1xf32> to vector<64x256xf32>
    %50 = arith.mulf %49, %44 : vector<64x256xf32>
    %51 = vector.extract_strided_slice %7 {offsets = [0, 3], sizes = [1, 1], strides = [1, 1]} : vector<1x4xf32> to vector<1x1xf32>
    %52 = vector.broadcast %51 : vector<1x1xf32> to vector<64x256xf32>
    %53 = arith.mulf %52, %47 : vector<64x256xf32>
    %54 = arith.addf %50, %53 : vector<64x256xf32>
    %c744 = arith.constant 744 : index
    %c0_26 = arith.constant 0 : index
    %55 = vector.load %arg2[%c744, %c0_26] : memref<1008x256xf32, #tpu.memory_space<vmem>>, vector<256x8xf32>
    %cst_27 = arith.constant dense<0.000000e+00> : vector<64x8xf32>
    %56 = tpu.matmul %54, %55, %cst_27 {dimension_numbers = #tpu.dot_dimension_numbers<[1], [0], [0], [1], [0, 0, 1, 1], [], []>} : vector<64x256xf32>, vector<256x8xf32>, vector<64x8xf32> -> vector<64x8xf32>
    %c1000 = arith.constant 1000 : index
    %c0_28 = arith.constant 0 : index
    %57 = vector.load %arg2[%c1000, %c0_28] : memref<1008x256xf32, #tpu.memory_space<vmem>>, vector<1x8xf32>
    %58 = vector.broadcast %57 : vector<1x8xf32> to vector<64x8xf32>
    %59 = arith.addf %56, %58 : vector<64x8xf32>
    %cst_29 = arith.constant dense<0xFF800000> : vector<64xf32>
    %60 = vector.multi_reduction <maximumf>, %59, %cst_29 [1] : vector<64x8xf32> to vector<64xf32>
    %61 = vector.shape_cast %60 : vector<64xf32> to vector<64x1xf32>
    %62 = vector.broadcast %61 : vector<64x1xf32> to vector<64x8xf32>
    %63 = arith.subf %59, %62 : vector<64x8xf32>
    %64 = math.exp %63 : vector<64x8xf32>
    %cst_30 = arith.constant dense<0.000000e+00> : vector<64xf32>
    %65 = vector.multi_reduction <add>, %64, %cst_30 [1] : vector<64x8xf32> to vector<64xf32>
    %66 = vector.shape_cast %65 : vector<64xf32> to vector<64x1xf32>
    %67 = math.log %66 : vector<64x1xf32>
    %68 = vector.broadcast %67 : vector<64x1xf32> to vector<64x8xf32>
    %69 = arith.subf %63, %68 : vector<64x8xf32>
    %c0_31 = arith.constant 0 : index
    %c0_32 = arith.constant 0 : index
    %70 = vector.load %arg3[%c0_31, %c0_32] : memref<64x8xf32, #tpu.memory_space<vmem>>, vector<64x8xf32>
    tpu.vector_store %arg3[%c0_31, %c0_32], %69 {strides = array<i32>} : memref<64x8xf32, #tpu.memory_space<vmem>>, vector<64x8xf32>,
    return
  }
}

</mosaic_0001>

<llo_original>
// kernel: fwd.1
$region0: #{fwd.1}
  #allocation0 [shape = 'u32[]', space=smem, size = 0x4, offset = 0x4, fixed_abs, tag = 'smem constant byte address 0x4 - core index']
  #allocation1 [shape = 'u32[144,128]{1,0:T(1,128)}', space=vmem, size = 0x12000, scoped, tag = 'internal scratch']
  %s0 = inlined_call_operand.hbm [shape: f32[64,64], index: 0, kind: input, shape index: {}]
  %s1 = inlined_call_operand.hbm [shape: f32[3,64,64], index: 1, kind: input, shape index: {}]
  %s2 = inlined_call_operand.hbm [shape: f32[1008,256], index: 2, kind: input, shape index: {}]
  %s3 = inlined_call_operand.vmem [shape: f32[64,8], index: 3, kind: output, shape index: {}]
  %s4 = sld [smem:[#allocation0]]
  $region34: #{fwd.1} parent=0
    _
  %s6 = ssub.s32 1, %s4
  %s7 = scalar_select 0, %s6, %s4
  $region1: #{fwd.1} parent=0
    #allocation2 [shape = 'u8[32768]{0}', space=vmem, size = 0x8000, scoped, tag = 'input window, operand 0, single buffered']
    #allocation3 [shape = 's32[1]{0}', space=sflag, size = 0x4, scoped, tag = 'scoped memory for fwd.1']
    #allocation4 [shape = 'u8[98304]{0}', space=vmem, size = 0x18000, scoped, tag = 'input window, operand 1, single buffered']
    #allocation5 [shape = 's32[1]{0}', space=sflag, size = 0x4, scoped, tag = 'scoped memory for fwd.1']
    #allocation6 [shape = 'u8[1032192]{0}', space=vmem, size = 0xfc000, scoped, tag = 'input window, operand 2, single buffered']
    %8 = vsyncpa [#allocation3], 0
    %9 = vsyncpa [#allocation5], 0
    // Predicated region
    $region2: #{fwd.1} parent=1 // pred_check
      _
    $region3: #{fwd.1} parent=1 // pred_check_branch
      %11 = sbr.rel (0) target = $region5
    $region4: #{fwd.1} parent=1 // pred_region
      %s13 = ssub.s32 1024, 1024
      %14 = vsyncadd [#allocation3], %s13
      %s15 = sshll.u32 [#allocation2], 4
      %s16 = int_to_ptr.vmem [resolvable:$true] %s15
      %21 = dma.hbm_to_vmem [thread:$0]  %s0, 1024, %s16, [#allocation3], 128, 128, 8
    $region5: #{fwd.1} parent=1 // pred_fallthru
      _
    // Predicated region
    $region6: #{fwd.1} parent=1 // pred_check
      _
    $region7: #{fwd.1} parent=1 // pred_check_branch
      %23 = sbr.rel (0) target = $region9
    $region8: #{fwd.1} parent=1 // pred_region
      %s25 = ssub.s32 3072, 3072
      %26 = vsyncadd [#allocation5], %s25
      %s27 = sshll.u32 [#allocation4], 4
      %s28 = int_to_ptr.vmem [resolvable:$true] %s27
      %33 = dma.hbm_to_vmem [thread:$0]  %s1, 3072, %s28, [#allocation5], 128, 128, 8
    $region9: #{fwd.1} parent=1 // pred_fallthru
      _
    // Predicated region
    $region10: #{fwd.1} parent=1 // pred_check
      _
    $region11: #{fwd.1} parent=1 // pred_check_branch
      %35 = sbr.rel (0) target = $region13
    $region12: #{fwd.1} parent=1 // pred_region
      %s37 = ssub.s32 32256, 32256
      %38 = vsyncadd [#allocation5], %s37
      %s39 = sshll.u32 [#allocation6], 4
      %s40 = int_to_ptr.vmem [resolvable:$true] %s39
      %45 = dma.hbm_to_vmem [thread:$0]  %s2, 32256, %s40, [#allocation5], 256, 256, 16
    $region13: #{fwd.1} parent=1 // pred_fallthru
      _
    // Predicated region
    $region14: #{fwd.1} parent=1 // pred_check
      _
    $region15: #{fwd.1} parent=1 // pred_check_branch
      %47 = sbr.rel (0) target = $region17
    $region16: #{fwd.1} parent=1 // pred_region
      %48 = dma.done [#allocation3], 1024
    $region17: #{fwd.1} parent=1 // pred_fallthru
      _
    // Predicated region
    $region18: #{fwd.1} parent=1 // pred_check
      _
    $region19: #{fwd.1} parent=1 // pred_check_branch
      %50 = sbr.rel (0) target = $region21
    $region20: #{fwd.1} parent=1 // pred_region
      %51 = dma.done [#allocation5], 3072
    $region21: #{fwd.1} parent=1 // pred_fallthru
      _
    // Predicated region
    $region22: #{fwd.1} parent=1 // pred_check
      _
    $region23: #{fwd.1} parent=1 // pred_check_branch
      %53 = sbr.rel (0) target = $region25
    $region24: #{fwd.1} parent=1 // pred_region
      %54 = dma.done [#allocation5], 32256
    $region25: #{fwd.1} parent=1 // pred_fallthru
      _
    %v55 = vld [vmem:[#allocation6] ss:$0 sm:$0xff]
    %v56 = vsub.f32 0.0, %v55
    %v57 = vmul.f32 %v56, 1.442695
    %v58 = vpow.pop %v57
    %v59 = vadd.f32 %v58, 1.0
    %v60 = vrcp.pop %v59
    %v61 = vmul.f32 1.0, %v60
    %v62 = vld [vmem:[#allocation2] sm:$0xff]
    %v63 = vld [vmem:[#allocation2 + $0x8] sm:$0xff]
    %v64 = vld [vmem:[#allocation2 + $0x10] sm:$0xff]
    %v65 = vld [vmem:[#allocation2 + $0x18] sm:$0xff]
    %v66 = vld [vmem:[#allocation2 + $0x20] sm:$0xff]
    %v67 = vld [vmem:[#allocation2 + $0x28] sm:$0xff]
    %v68 = vld [vmem:[#allocation2 + $0x30] sm:$0xff]
    %v69 = vld [vmem:[#allocation2 + $0x38] sm:$0xff]
    %v70 = vld [vmem:[#allocation6 + $0x10] sm:$0xff]
    %v71 = vld [vmem:[#allocation6 + $0x20] sm:$0xff]
    %v72 = vld [vmem:[#allocation6 + $0x30] sm:$0xff]
    %v73 = vld [vmem:[#allocation6 + $0x40] sm:$0xff]
    %v74 = vld [vmem:[#allocation6 + $0x50] sm:$0xff]
    %v75 = vld [vmem:[#allocation6 + $0x60] sm:$0xff]
    %v76 = vld [vmem:[#allocation6 + $0x70] sm:$0xff]
    %v77 = vld [vmem:[#allocation6 + $0x80] sm:$0xff]
    %v78 = vld [vmem:[#allocation6 + $0x90] ss:$0 sm:$0xff]
    %vm79 = vcmask 523264
    %v81 = vsel %vm79, %v62, 0
    %v84 = vsel %vm79, %v63, 0
    %v87 = vsel %vm79, %v64, 0
    %v90 = vsel %vm79, %v65, 0
    %v93 = vsel %vm79, %v66, 0
    %v96 = vsel %vm79, %v67, 0
    %v99 = vsel %vm79, %v68, 0
    %v102 = vsel %vm79, %v69, 0
    %104 = vmatprep.subr.mxu0 0.0
    %105 = vmatpush1.msra.mxu0 %v70
    %106 = vmatprep.subr.mxu0 0.0
    %107 = vmatpush1.msra.mxu0 %v71
    %108 = vmatprep.subr.mxu0 0.0
    %109 = vmatpush1.msra.mxu0 %v72
    %110 = vmatprep.subr.mxu0 0.0
    %111 = vmatpush1.msra.mxu0 %v73
    %112 = vmatprep.subr.mxu0 0.0
    %113 = vmatpush1.msra.mxu0 %v74
    %114 = vmatprep.subr.mxu0 0.0
    %115 = vmatpush1.msra.mxu0 %v75
    %116 = vmatprep.subr.mxu0 0.0
    %117 = vmatpush1.msra.mxu0 %v76
    %118 = vmatprep.subr.mxu0 0.0
    %119 = vmatpush1.msra.mxu0 %v77
    %120 = vmatprep.subr.mxu0 0.0
    %121 = vmatpush1.msra.mxu0 0.0
    %122 = vmatprep.subr.mxu0 0.0
    %123 = vmatpush1.msra.mxu0 0.0
    %124 = vmatprep.subr.mxu0 0.0
    %125 = vmatpush1.msra.mxu0 0.0
    %126 = vmatprep.subr.mxu0 0.0
    %127 = vmatpush1.msra.mxu0 0.0
    %128 = vmatprep.subr.mxu0 0.0
    %129 = vmatpush1.msra.mxu0 0.0
    %130 = vmatprep.subr.mxu0 0.0
    %131 = vmatpush1.msra.mxu0 0.0
    %132 = vmatprep.subr.mxu0 0.0
    %133 = vmatpush1.msra.mxu0 0.0
    %134 = vmatprep.subr.mxu0 0.0
    %135 = vmatpush1.msra.mxu0 0.0
    %136 = vmatprep.subr.mxu0 0.0
    %137 = vmatpush1.msra.mxu0 0.0
    %138 = vmatprep.subr.mxu0 0.0
    %139 = vmatpush1.msra.mxu0 0.0
    %140 = vmatprep.subr.mxu0 0.0
    %141 = vmatpush1.msra.mxu0 0.0
    %142 = vmatprep.subr.mxu0 0.0
    %143 = vmatpush1.msra.mxu0 0.0
    %144 = vmatprep.subr.mxu0 0.0
    %145 = vmatpush1.msra.mxu0 0.0
    %146 = vmatprep.subr.mxu0 0.0
    %147 = vmatpush1.msra.mxu0 0.0
    %148 = vmatprep.subr.mxu0 0.0
    %149 = vmatpush1.msra.mxu0 0.0
    %150 = vmatprep.subr.mxu0 0.0
    %151 = vmatpush1.msra.mxu0 0.0
    %152 = vmatprep.subr.mxu0 0.0
    %153 = vmatpush1.msra.mxu0 0.0
    %154 = vmatprep.subr.mxu0 0.0
    %155 = vmatpush1.msra.mxu0 0.0
    %156 = vmatprep.subr.mxu0 0.0
    %157 = vmatpush1.msra.mxu0 0.0
    %158 = vmatprep.subr.mxu0 0.0
    %159 = vmatpush1.msra.mxu0 0.0
    %160 = vmatprep.subr.mxu0 0.0
    %161 = vmatpush1.msra.mxu0 0.0
    %162 = vmatprep.subr.mxu0 0.0
    %163 = vmatpush1.msra.mxu0 0.0
    %164 = vmatprep.subr.mxu0 0.0
    %165 = vmatpush1.msra.mxu0 0.0
    %166 = vmatprep.subr.mxu0 0.0
    %167 = vmatpush1.msra.mxu0 0.0
    %168 = vmatprep.mubr.f32.mxu0 0.0
    %169 = vmatmul.mubr.f32.gmra.mrb[0].mxu0 %v81
    %v170 = vpop.f32.mrb[0].mxu0
    %v171 = vadd.f32 %v78, %v170
    %v172 = vpop.f32.mrb[0].mxu0
    %173 = vmatprep.mubr.f32.mxu0 0.0
    %174 = vmatmul.mubr.f32.gmra.mrb[0].mxu0 %v84
    %v175 = vpop.f32.mrb[0].mxu0
    %v176 = vadd.f32 %v78, %v175
    %v177 = vpop.f32.mrb[0].mxu0
    %178 = vmatprep.mubr.f32.mxu0 0.0
    %179 = vmatmul.mubr.f32.gmra.mrb[0].mxu0 %v87
    %v180 = vpop.f32.mrb[0].mxu0
    %v181 = vadd.f32 %v78, %v180
    %v182 = vpop.f32.mrb[0].mxu0
    %183 = vmatprep.mubr.f32.mxu0 0.0
    %184 = vmatmul.mubr.f32.gmra.mrb[0].mxu0 %v90
    %v185 = vpop.f32.mrb[0].mxu0
    %v186 = vadd.f32 %v78, %v185
    %v187 = vpop.f32.mrb[0].mxu0
    %188 = vmatprep.mubr.f32.mxu0 0.0
    %189 = vmatmul.mubr.f32.gmra.mrb[0].mxu0 %v93
    %v190 = vpop.f32.mrb[0].mxu0
    %v191 = vadd.f32 %v78, %v190
    %v192 = vpop.f32.mrb[0].mxu0
    %193 = vmatprep.mubr.f32.mxu0 0.0
    %194 = vmatmul.mubr.f32.gmra.mrb[0].mxu0 %v96
    %v195 = vpop.f32.mrb[0].mxu0
    %v196 = vadd.f32 %v78, %v195
    %v197 = vpop.f32.mrb[0].mxu0
    %198 = vmatprep.mubr.f32.mxu0 0.0
    %199 = vmatmul.mubr.f32.gmra.mrb[0].mxu0 %v99
    %v200 = vpop.f32.mrb[0].mxu0
    %v201 = vadd.f32 %v78, %v200
    %v202 = vpop.f32.mrb[0].mxu0
    %203 = vmatprep.mubr.f32.mxu0 0.0
    %204 = vmatmul.mubr.f32.gmra.mrb[0].mxu0 %v102
    %v205 = vpop.f32.mrb[0].mxu0
    %v206 = vadd.f32 %v78, %v205
    %v207 = vpop.f32.mrb[0].mxu0
    %208 = vdwg.mxu0
    %210 = vset.pattern.permute.xlu0 0
    %211 = vperm.xlu0 %210, %v61
    %v212 = vpop.permute.xlu0 %211
    %v214 = vmul.f32 %v212, %v171
    %v215 = vmul.f32 %v212, %v176
    %v216 = vmul.f32 %v212, %v181
    %v217 = vmul.f32 %v212, %v186
    %v218 = vmul.f32 %v212, %v191
    %v219 = vmul.f32 %v212, %v196
    %v220 = vmul.f32 %v212, %v201
    %v221 = vmul.f32 %v212, %v206
    %v222 = vadd.f32 %v214, %v214
    %v223 = vadd.f32 %v215, %v215
    %v224 = vadd.f32 %v216, %v216
    %v225 = vadd.f32 %v217, %v217
    %v226 = vadd.f32 %v218, %v218
    %v227 = vadd.f32 %v219, %v219
    %v228 = vadd.f32 %v220, %v220
    %v229 = vadd.f32 %v221, %v221
    %v230 = vld [vmem:[#allocation6 + $0xa0] sm:$0xff]
    %v231 = vld [vmem:[#allocation6 + $0xa8] sm:$0xff]
    %v232 = vld [vmem:[#allocation6 + $0xb0] sm:$0xff]
    %v233 = vld [vmem:[#allocation6 + $0xb8] sm:$0xff]
    %v234 = vld [vmem:[#allocation6 + $0xc0] sm:$0xff]
    %v235 = vld [vmem:[#allocation6 + $0xc8] sm:$0xff]
    %v236 = vld [vmem:[#allocation6 + $0xd0] sm:$0xff]
    %v237 = vld [vmem:[#allocation6 + $0xd8] sm:$0xff]
    %v238 = vld [vmem:[#allocation6 + $0xe0] sm:$0xff]
    %v239 = vld [vmem:[#allocation6 + $0xe8] sm:$0xff]
    %v240 = vld [vmem:[#allocation6 + $0xf0] sm:$0xff]
    %v241 = vld [vmem:[#allocation6 + $0xf8] sm:$0xff]
    %v242 = vld [vmem:[#allocation6 + $0x100] sm:$0xff]
    %v243 = vld [vmem:[#allocation6 + $0x108] sm:$0xff]
    %v244 = vld [vmem:[#allocation6 + $0x110] sm:$0xff]
    %v245 = vld [vmem:[#allocation6 + $0x118] sm:$0xff]
    %v246 = vld [vmem:[#allocation6 + $0x120] sm:$0xff]
    %v247 = vld [vmem:[#allocation6 + $0x128] sm:$0xff]
    %v248 = vld [vmem:[#allocation6 + $0x130] sm:$0xff]
    %v249 = vld [vmem:[#allocation6 + $0x138] sm:$0xff]
    %v250 = vld [vmem:[#allocation6 + $0x140] sm:$0xff]
    %v251 = vld [vmem:[#allocation6 + $0x148] sm:$0xff]
    %v252 = vld [vmem:[#allocation6 + $0x150] sm:$0xff]
    %v253 = vld [vmem:[#allocation6 + $0x158] sm:$0xff]
    %v254 = vld [vmem:[#allocation6 + $0x160] sm:$0xff]
    %v255 = vld [vmem:[#allocation6 + $0x168] sm:$0xff]
    %v256 = vld [vmem:[#allocation6 + $0x170] sm:$0xff]
    %v257 = vld [vmem:[#allocation6 + $0x178] sm:$0xff]
    %v258 = vld [vmem:[#allocation6 + $0x180] sm:$0xff]
    %v259 = vld [vmem:[#allocation6 + $0x188] sm:$0xff]
    %v260 = vld [vmem:[#allocation6 + $0x190] sm:$0xff]
    %v261 = vld [vmem:[#allocation6 + $0x198] sm:$0xff]
    %s262 = scalar_lea.vmem [#allocation6], 416
    %v263 = vld [vmem:[%s262] ss:$8 sm:$0x3]
    %v265 = vlaneseq
    %v266 = vshrl.u32 %v265, 7
    %v267 = vsub.s32 0, %v266
    %v268 = vrot.slane %v263, %v267
    %v269 = vlaneseq
    %v270 = vshrl.u32 %v269, 7
    %v271 = vsub.s32 1, %v270
    %v272 = vrot.slane %v263, %v271
    %275 = vmatprep.subr.mxu0 %v231
    %276 = vmatpush1.msra.mxu0 %v230
    %277 = vmatprep.subr.mxu0 %v233
    %278 = vmatpush1.msra.mxu0 %v232
    %279 = vmatprep.subr.mxu0 %v235
    %280 = vmatpush1.msra.mxu0 %v234
    %281 = vmatprep.subr.mxu0 %v237
    %282 = vmatpush1.msra.mxu0 %v236
    %283 = vmatprep.subr.mxu0 %v239
    %284 = vmatpush1.msra.mxu0 %v238
    %285 = vmatprep.subr.mxu0 %v241
    %286 = vmatpush1.msra.mxu0 %v240
    %287 = vmatprep.subr.mxu0 %v243
    %288 = vmatpush1.msra.mxu0 %v242
    %289 = vmatprep.subr.mxu0 %v245
    %290 = vmatpush1.msra.mxu0 %v244
    %291 = vmatprep.subr.mxu0 %v247
    %292 = vmatpush1.msra.mxu0 %v246
    %293 = vmatprep.subr.mxu0 %v249
    %294 = vmatpush1.msra.mxu0 %v248
    %295 = vmatprep.subr.mxu0 %v251
    %296 = vmatpush1.msra.mxu0 %v250
    %297 = vmatprep.subr.mxu0 %v253
    %298 = vmatpush1.msra.mxu0 %v252
    %299 = vmatprep.subr.mxu0 %v255
    %300 = vmatpush1.msra.mxu0 %v254
    %301 = vmatprep.subr.mxu0 %v257
    %302 = vmatpush1.msra.mxu0 %v256
    %303 = vmatprep.subr.mxu0 %v259
    %304 = vmatpush1.msra.mxu0 %v258
    %305 = vmatprep.subr.mxu0 %v261
    %306 = vmatpush1.msra.mxu0 %v260
    %307 = vmatprep.subr.mxu0 0.0
    %308 = vmatpush1.msra.mxu0 0.0
    %309 = vmatprep.subr.mxu0 0.0
    %310 = vmatpush1.msra.mxu0 0.0
    %311 = vmatprep.subr.mxu0 0.0
    %312 = vmatpush1.msra.mxu0 0.0
    %313 = vmatprep.subr.mxu0 0.0
    %314 = vmatpush1.msra.mxu0 0.0
    %315 = vmatprep.subr.mxu0 0.0
    %316 = vmatpush1.msra.mxu0 0.0
    %317 = vmatprep.subr.mxu0 0.0
    %318 = vmatpush1.msra.mxu0 0.0
    %319 = vmatprep.subr.mxu0 0.0
    %320 = vmatpush1.msra.mxu0 0.0
    %321 = vmatprep.subr.mxu0 0.0
    %322 = vmatpush1.msra.mxu0 0.0
    %323 = vmatprep.subr.mxu0 0.0
    %324 = vmatpush1.msra.mxu0 0.0
    %325 = vmatprep.subr.mxu0 0.0
    %326 = vmatpush1.msra.mxu0 0.0
    %327 = vmatprep.subr.mxu0 0.0
    %328 = vmatpush1.msra.mxu0 0.0
    %329 = vmatprep.subr.mxu0 0.0
    %330 = vmatpush1.msra.mxu0 0.0
    %331 = vmatprep.subr.mxu0 0.0
    %332 = vmatpush1.msra.mxu0 0.0
    %333 = vmatprep.subr.mxu0 0.0
    %334 = vmatpush1.msra.mxu0 0.0
    %335 = vmatprep.subr.mxu0 0.0
    %336 = vmatpush1.msra.mxu0 0.0
    %337 = vmatprep.subr.mxu0 0.0
    %338 = vmatpush1.msra.mxu0 0.0
    %339 = vmatprep.mubr.f32.mxu0 0.0
    %340 = vmatmul.mubr.f32.gmra.mrb[0].mxu0 %v222
    %v341 = vpop.f32.mrb[0].mxu0
    %v342 = vadd.f32 %v268, %v341
    %v343 = vpop.f32.mrb[0].mxu0
    %v344 = vadd.f32 %v272, %v343
    %345 = vmatprep.mubr.f32.mxu0 0.0
    %346 = vmatmul.mubr.f32.gmra.mrb[0].mxu0 %v223
    %v347 = vpop.f32.mrb[0].mxu0
    %v348 = vadd.f32 %v268, %v347
    %v349 = vpop.f32.mrb[0].mxu0
    %v350 = vadd.f32 %v272, %v349
    %351 = vmatprep.mubr.f32.mxu0 0.0
    %352 = vmatmul.mubr.f32.gmra.mrb[0].mxu0 %v224
    %v353 = vpop.f32.mrb[0].mxu0
    %v354 = vadd.f32 %v268, %v353
    %v355 = vpop.f32.mrb[0].mxu0
    %v356 = vadd.f32 %v272, %v355
    %357 = vmatprep.mubr.f32.mxu0 0.0
    %358 = vmatmul.mubr.f32.gmra.mrb[0].mxu0 %v225
    %v359 = vpop.f32.mrb[0].mxu0
    %v360 = vadd.f32 %v268, %v359
    %v361 = vpop.f32.mrb[0].mxu0
    %v362 = vadd.f32 %v272, %v361
    %363 = vmatprep.mubr.f32.mxu0 0.0
    %364 = vmatmul.mubr.f32.gmra.mrb[0].mxu0 %v226
    %v365 = vpop.f32.mrb[0].mxu0
    %v366 = vadd.f32 %v268, %v365
    %v367 = vpop.f32.mrb[0].mxu0
    %v368 = vadd.f32 %v272, %v367
    %369 = vmatprep.mubr.f32.mxu0 0.0
    %370 = vmatmul.mubr.f32.gmra.mrb[0].mxu0 %v227
    %v371 = vpop.f32.mrb[0].mxu0
    %v372 = vadd.f32 %v268, %v371
    %v373 = vpop.f32.mrb[0].mxu0
    %v374 = vadd.f32 %v272, %v373
    %375 = vmatprep.mubr.f32.mxu0 0.0
    %376 = vmatmul.mubr.f32.gmra.mrb[0].mxu0 %v228
    %v377 = vpop.f32.mrb[0].mxu0
    %v378 = vadd.f32 %v268, %v377
    %v379 = vpop.f32.mrb[0].mxu0
    %v380 = vadd.f32 %v272, %v379
    %381 = vmatprep.mubr.f32.mxu0 0.0
    %382 = vmatmul.mubr.f32.gmra.mrb[0].mxu0 %v229
    %v383 = vpop.f32.mrb[0].mxu0
    %v384 = vadd.f32 %v268, %v383
    %v385 = vpop.f32.mrb[0].mxu0
    %v386 = vadd.f32 %v272, %v385
    %387 = vdwg.mxu0
    %v388 = vmax.f32 %v342, 0.0
    %v389 = vmax.f32 %v344, 0.0
    %v390 = vmax.f32 %v348, 0.0
    %v391 = vmax.f32 %v350, 0.0
    %v392 = vmax.f32 %v354, 0.0
    %v393 = vmax.f32 %v356, 0.0
    %v394 = vmax.f32 %v360, 0.0
    %v395 = vmax.f32 %v362, 0.0
    %v396 = vmax.f32 %v366, 0.0
    %v397 = vmax.f32 %v368, 0.0
    %v398 = vmax.f32 %v372, 0.0
    %v399 = vmax.f32 %v374, 0.0
    %v400 = vmax.f32 %v378, 0.0
    %v401 = vmax.f32 %v380, 0.0
    %v402 = vmax.f32 %v384, 0.0
    %v403 = vmax.f32 %v386, 0.0
    %v404 = vld [vmem:[#allocation6 + $0x3c0] sm:$0xff]
    %v405 = vld [vmem:[#allocation6 + $0x3c8] sm:$0xff]
    %v406 = vld [vmem:[#allocation6 + $0x3d0] sm:$0xff]
    %v407 = vld [vmem:[#allocation6 + $0x3d8] sm:$0xff]
    %v408 = vld [vmem:[#allocation6 + $0x3e0] sm:$0xff]
    %v409 = vld [vmem:[#allocation6 + $0x3e8] sm:$0xff]
    %v410 = vld [vmem:[#allocation6 + $0x3f0] sm:$0xff]
    %v411 = vld [vmem:[#allocation6 + $0x3f8] sm:$0xff]
    %v412 = vld [vmem:[#allocation6 + $0x400] sm:$0xff]
    %v413 = vld [vmem:[#allocation6 + $0x408] sm:$0xff]
    %v414 = vld [vmem:[#allocation6 + $0x410] sm:$0xff]
    %v415 = vld [vmem:[#allocation6 + $0x418] sm:$0xff]
    %v416 = vld [vmem:[#allocation6 + $0x420] sm:$0xff]
    %v417 = vld [vmem:[#allocation6 + $0x428] sm:$0xff]
    %v418 = vld [vmem:[#allocation6 + $0x430] sm:$0xff]
    %v419 = vld [vmem:[#allocation6 + $0x438] sm:$0xff]
    %v420 = vld [vmem:[#allocation6 + $0x440] sm:$0xff]
    %v421 = vld [vmem:[#allocation6 + $0x448] sm:$0xff]
    %v422 = vld [vmem:[#allocation6 + $0x450] sm:$0xff]
    %v423 = vld [vmem:[#allocation6 + $0x458] sm:$0xff]
    %v424 = vld [vmem:[#allocation6 + $0x460] sm:$0xff]
    %v425 = vld [vmem:[#allocation6 + $0x468] sm:$0xff]
    %v426 = vld [vmem:[#allocation6 + $0x470] sm:$0xff]
    %v427 = vld [vmem:[#allocation6 + $0x478] sm:$0xff]
    %v428 = vld [vmem:[#allocation6 + $0x480] sm:$0xff]
    %v429 = vld [vmem:[#allocation6 + $0x488] sm:$0xff]
    %v430 = vld [vmem:[#allocation6 + $0x490] sm:$0xff]
    %v431 = vld [vmem:[#allocation6 + $0x498] sm:$0xff]
    %v432 = vld [vmem:[#allocation6 + $0x4a0] sm:$0xff]
    %v433 = vld [vmem:[#allocation6 + $0x4a8] sm:$0xff]
    %v434 = vld [vmem:[#allocation6 + $0x4b0] sm:$0xff]
    %v435 = vld [vmem:[#allocation6 + $0x4b8] sm:$0xff]
    %v436 = vld [vmem:[#allocation6 + $0x4c0] sm:$0xff]
    %v437 = vld [vmem:[#allocation6 + $0x4c8] sm:$0xff]
    %v438 = vld [vmem:[#allocation6 + $0x4d0] sm:$0xff]
    %v439 = vld [vmem:[#allocation6 + $0x4d8] sm:$0xff]
    %v440 = vld [vmem:[#allocation6 + $0x4e0] sm:$0xff]
    %v441 = vld [vmem:[#allocation6 + $0x4e8] sm:$0xff]
    %v442 = vld [vmem:[#allocation6 + $0x4f0] sm:$0xff]
    %v443 = vld [vmem:[#allocation6 + $0x4f8] sm:$0xff]
    %v444 = vld [vmem:[#allocation6 + $0x500] sm:$0xff]
    %v445 = vld [vmem:[#allocation6 + $0x508] sm:$0xff]
    %v446 = vld [vmem:[#allocation6 + $0x510] sm:$0xff]
    %v447 = vld [vmem:[#allocation6 + $0x518] sm:$0xff]
    %v448 = vld [vmem:[#allocation6 + $0x520] sm:$0xff]
    %v449 = vld [vmem:[#allocation6 + $0x528] sm:$0xff]
    %v450 = vld [vmem:[#allocation6 + $0x530] sm:$0xff]
    %v451 = vld [vmem:[#allocation6 + $0x538] sm:$0xff]
    %v452 = vld [vmem:[#allocation6 + $0x540] sm:$0xff]
    %v453 = vld [vmem:[#allocation6 + $0x548] sm:$0xff]
    %v454 = vld [vmem:[#allocation6 + $0x550] sm:$0xff]
    %v455 = vld [vmem:[#allocation6 + $0x558] sm:$0xff]
    %v456 = vld [vmem:[#allocation6 + $0x560] sm:$0xff]
    %v457 = vld [vmem:[#allocation6 + $0x568] sm:$0xff]
    %v458 = vld [vmem:[#allocation6 + $0x570] sm:$0xff]
    %v459 = vld [vmem:[#allocation6 + $0x578] sm:$0xff]
    %v460 = vld [vmem:[#allocation6 + $0x580] sm:$0xff]
    %v461 = vld [vmem:[#allocation6 + $0x588] sm:$0xff]
    %v462 = vld [vmem:[#allocation6 + $0x590] sm:$0xff]
    %v463 = vld [vmem:[#allocation6 + $0x598] sm:$0xff]
    %v464 = vld [vmem:[#allocation6 + $0x5a0] sm:$0xff]
    %v465 = vld [vmem:[#allocation6 + $0x5a8] sm:$0xff]
    %v466 = vld [vmem:[#allocation6 + $0x5b0] sm:$0xff]
    %v467 = vld [vmem:[#allocation6 + $0x5b8] sm:$0xff]
    %s468 = scalar_lea.vmem [#allocation6], 1472
    %v469 = vld [vmem:[%s468] ss:$8 sm:$0x3]
    %v471 = vlaneseq
    %v472 = vshrl.u32 %v471, 7
    %v473 = vsub.s32 0, %v472
    %v474 = vrot.slane %v469, %v473
    %v475 = vlaneseq
    %v476 = vshrl.u32 %v475, 7
    %v477 = vsub.s32 1, %v476
    %v478 = vrot.slane %v469, %v477
    %481 = vmatprep.subr.mxu0 %v405
    %482 = vmatpush1.msra.mxu0 %v404
    %483 = vmatprep.subr.mxu0 %v407
    %484 = vmatpush1.msra.mxu0 %v406
    %485 = vmatprep.subr.mxu0 %v409
    %486 = vmatpush1.msra.mxu0 %v408
    %487 = vmatprep.subr.mxu0 %v411
    %488 = vmatpush1.msra.mxu0 %v410
    %489 = vmatprep.subr.mxu0 %v413
    %490 = vmatpush1.msra.mxu0 %v412
    %491 = vmatprep.subr.mxu0 %v415
    %492 = vmatpush1.msra.mxu0 %v414
    %493 = vmatprep.subr.mxu0 %v417
    %494 = vmatpush1.msra.mxu0 %v416
    %495 = vmatprep.subr.mxu0 %v419
    %496 = vmatpush1.msra.mxu0 %v418
    %497 = vmatprep.subr.mxu0 %v421
    %498 = vmatpush1.msra.mxu0 %v420
    %499 = vmatprep.subr.mxu0 %v423
    %500 = vmatpush1.msra.mxu0 %v422
    %501 = vmatprep.subr.mxu0 %v425
    %502 = vmatpush1.msra.mxu0 %v424
    %503 = vmatprep.subr.mxu0 %v427
    %504 = vmatpush1.msra.mxu0 %v426
    %505 = vmatprep.subr.mxu0 %v429
    %506 = vmatpush1.msra.mxu0 %v428
    %507 = vmatprep.subr.mxu0 %v431
    %508 = vmatpush1.msra.mxu0 %v430
    %509 = vmatprep.subr.mxu0 %v433
    %510 = vmatpush1.msra.mxu0 %v432
    %511 = vmatprep.subr.mxu0 %v435
    %512 = vmatpush1.msra.mxu0 %v434
    %513 = vmatprep.subr.mxu0 %v437
    %514 = vmatpush1.msra.mxu0 %v436
    %515 = vmatprep.subr.mxu0 %v439
    %516 = vmatpush1.msra.mxu0 %v438
    %517 = vmatprep.subr.mxu0 %v441
    %518 = vmatpush1.msra.mxu0 %v440
    %519 = vmatprep.subr.mxu0 %v443
    %520 = vmatpush1.msra.mxu0 %v442
    %521 = vmatprep.subr.mxu0 %v445
    %522 = vmatpush1.msra.mxu0 %v444
    %523 = vmatprep.subr.mxu0 %v447
    %524 = vmatpush1.msra.mxu0 %v446
    %525 = vmatprep.subr.mxu0 %v449
    %526 = vmatpush1.msra.mxu0 %v448
    %527 = vmatprep.subr.mxu0 %v451
    %528 = vmatpush1.msra.mxu0 %v450
    %529 = vmatprep.subr.mxu0 %v453
    %530 = vmatpush1.msra.mxu0 %v452
    %531 = vmatprep.subr.mxu0 %v455
    %532 = vmatpush1.msra.mxu0 %v454
    %533 = vmatprep.subr.mxu0 %v457
    %534 = vmatpush1.msra.mxu0 %v456
    %535 = vmatprep.subr.mxu0 %v459
    %536 = vmatpush1.msra.mxu0 %v458
    %537 = vmatprep.subr.mxu0 %v461
    %538 = vmatpush1.msra.mxu0 %v460
    %539 = vmatprep.subr.mxu0 %v463
    %540 = vmatpush1.msra.mxu0 %v462
    %541 = vmatprep.subr.mxu0 %v465
    %542 = vmatpush1.msra.mxu0 %v464
    %543 = vmatprep.subr.mxu0 %v467
    %544 = vmatpush1.msra.mxu0 %v466
    %545 = vmatprep.mubr.f32.mxu0 %v389
    %546 = vmatmul.mubr.f32.gmra.mrb[0].mxu0 %v388
    %v547 = vpop.f32.mrb[0].mxu0
    %v548 = vadd.f32 %v474, %v547
    %v549 = vpop.f32.mrb[0].mxu0
    %v550 = vadd.f32 %v478, %v549
    %551 = vmatprep.mubr.f32.mxu0 %v391
    %552 = vmatmul.mubr.f32.gmra.mrb[0].mxu0 %v390
    %v553 = vpop.f32.mrb[0].mxu0
    %v554 = vadd.f32 %v474, %v553
    %v555 = vpop.f32.mrb[0].mxu0
    %v556 = vadd.f32 %v478, %v555
    %557 = vmatprep.mubr.f32.mxu0 %v393
    %558 = vmatmul.mubr.f32.gmra.mrb[0].mxu0 %v392
    %v559 = vpop.f32.mrb[0].mxu0
    %v560 = vadd.f32 %v474, %v559
    %v561 = vpop.f32.mrb[0].mxu0
    %v562 = vadd.f32 %v478, %v561
    %563 = vmatprep.mubr.f32.mxu0 %v395
    %564 = vmatmul.mubr.f32.gmra.mrb[0].mxu0 %v394
    %v565 = vpop.f32.mrb[0].mxu0
    %v566 = vadd.f32 %v474, %v565
    %v567 = vpop.f32.mrb[0].mxu0
    %v568 = vadd.f32 %v478, %v567
    %569 = vmatprep.mubr.f32.mxu0 %v397
    %570 = vmatmul.mubr.f32.gmra.mrb[0].mxu0 %v396
    %v571 = vpop.f32.mrb[0].mxu0
    %v572 = vadd.f32 %v474, %v571
    %v573 = vpop.f32.mrb[0].mxu0
    %v574 = vadd.f32 %v478, %v573
    %575 = vmatprep.mubr.f32.mxu0 %v399
    %576 = vmatmul.mubr.f32.gmra.mrb[0].mxu0 %v398
    %v577 = vpop.f32.mrb[0].mxu0
    %v578 = vadd.f32 %v474, %v577
    %v579 = vpop.f32.mrb[0].mxu0
    %v580 = vadd.f32 %v478, %v579
    %581 = vmatprep.mubr.f32.mxu0 %v401
    %582 = vmatmul.mubr.f32.gmra.mrb[0].mxu0 %v400
    %v583 = vpop.f32.mrb[0].mxu0
    %v584 = vadd.f32 %v474, %v583
    %v585 = vpop.f32.mrb[0].mxu0
    %v586 = vadd.f32 %v478, %v585
    %587 = vmatprep.mubr.f32.mxu0 %v403
    %588 = vmatmul.mubr.f32.gmra.mrb[0].mxu0 %v402
    %v589 = vpop.f32.mrb[0].mxu0
    %v590 = vadd.f32 %v474, %v589
    %v591 = vpop.f32.mrb[0].mxu0
    %v592 = vadd.f32 %v478, %v591
    %593 = vdwg.mxu0
    %v594 = vmax.f32 %v548, 0.0
    %v595 = vmax.f32 %v550, 0.0
    %v596 = vmax.f32 %v554, 0.0
    %v597 = vmax.f32 %v556, 0.0
    %v598 = vmax.f32 %v560, 0.0
    %v599 = vmax.f32 %v562, 0.0
    %v600 = vmax.f32 %v566, 0.0
    %v601 = vmax.f32 %v568, 0.0
    %v602 = vmax.f32 %v572, 0.0
    %v603 = vmax.f32 %v574, 0.0
    %v604 = vmax.f32 %v578, 0.0
    %v605 = vmax.f32 %v580, 0.0
    %v606 = vmax.f32 %v584, 0.0
    %v607 = vmax.f32 %v586, 0.0
    %v608 = vmax.f32 %v590, 0.0
    %v609 = vmax.f32 %v592, 0.0
    %v610 = vld [vmem:[#allocation6 + $0x1b0] sm:$0xff]
    %v611 = vld [vmem:[#allocation6 + $0x1b8] sm:$0xff]
    %v612 = vld [vmem:[#allocation6 + $0x1c0] sm:$0xff]
    %v613 = vld [vmem:[#allocation6 + $0x1c8] sm:$0xff]
    %v614 = vld [vmem:[#allocation6 + $0x1d0] sm:$0xff]
    %v615 = vld [vmem:[#allocation6 + $0x1d8] sm:$0xff]
    %v616 = vld [vmem:[#allocation6 + $0x1e0] sm:$0xff]
    %v617 = vld [vmem:[#allocation6 + $0x1e8] sm:$0xff]
    %v618 = vld [vmem:[#allocation6 + $0x1f0] sm:$0xff]
    %v619 = vld [vmem:[#allocation6 + $0x1f8] sm:$0xff]
    %v620 = vld [vmem:[#allocation6 + $0x200] sm:$0xff]
    %v621 = vld [vmem:[#allocation6 + $0x208] sm:$0xff]
    %v622 = vld [vmem:[#allocation6 + $0x210] sm:$0xff]
    %v623 = vld [vmem:[#allocation6 + $0x218] sm:$0xff]
    %v624 = vld [vmem:[#allocation6 + $0x220] sm:$0xff]
    %v625 = vld [vmem:[#allocation6 + $0x228] sm:$0xff]
    %v626 = vld [vmem:[#allocation6 + $0x230] sm:$0xff]
    %v627 = vld [vmem:[#allocation6 + $0x238] sm:$0xff]
    %v628 = vld [vmem:[#allocation6 + $0x240] sm:$0xff]
    %v629 = vld [vmem:[#allocation6 + $0x248] sm:$0xff]
    %v630 = vld [vmem:[#allocation6 + $0x250] sm:$0xff]
    %v631 = vld [vmem:[#allocation6 + $0x258] sm:$0xff]
    %v632 = vld [vmem:[#allocation6 + $0x260] sm:$0xff]
    %v633 = vld [vmem:[#allocation6 + $0x268] sm:$0xff]
    %v634 = vld [vmem:[#allocation6 + $0x270] sm:$0xff]
    %v635 = vld [vmem:[#allocation6 + $0x278] sm:$0xff]
    %v636 = vld [vmem:[#allocation6 + $0x280] sm:$0xff]
    %v637 = vld [vmem:[#allocation6 + $0x288] sm:$0xff]
    %v638 = vld [vmem:[#allocation6 + $0x290] sm:$0xff]
    %v639 = vld [vmem:[#allocation6 + $0x298] sm:$0xff]
    %v640 = vld [vmem:[#allocation6 + $0x2a0] sm:$0xff]
    %v641 = vld [vmem:[#allocation6 + $0x2a8] sm:$0xff]
    %v642 = vld [vmem:[#allocation6 + $0x2b0] sm:$0xff]
    %v643 = vld [vmem:[#allocation6 + $0x2b8] sm:$0xff]
    %v644 = vld [vmem:[#allocation6 + $0x2c0] sm:$0xff]
    %v645 = vld [vmem:[#allocation6 + $0x2c8] sm:$0xff]
    %v646 = vld [vmem:[#allocation6 + $0x2d0] sm:$0xff]
    %v647 = vld [vmem:[#allocation6 + $0x2d8] sm:$0xff]
    %v648 = vld [vmem:[#allocation6 + $0x2e0] sm:$0xff]
    %v649 = vld [vmem:[#allocation6 + $0x2e8] sm:$0xff]
    %v650 = vld [vmem:[#allocation6 + $0x2f0] sm:$0xff]
    %v651 = vld [vmem:[#allocation6 + $0x2f8] sm:$0xff]
    %v652 = vld [vmem:[#allocation6 + $0x300] sm:$0xff]
    %v653 = vld [vmem:[#allocation6 + $0x308] sm:$0xff]
    %v654 = vld [vmem:[#allocation6 + $0x310] sm:$0xff]
    %v655 = vld [vmem:[#allocation6 + $0x318] sm:$0xff]
    %v656 = vld [vmem:[#allocation6 + $0x320] sm:$0xff]
    %v657 = vld [vmem:[#allocation6 + $0x328] sm:$0xff]
    %v658 = vld [vmem:[#allocation6 + $0x330] sm:$0xff]
    %v659 = vld [vmem:[#allocation6 + $0x338] sm:$0xff]
    %v660 = vld [vmem:[#allocation6 + $0x340] sm:$0xff]
    %v661 = vld [vmem:[#allocation6 + $0x348] sm:$0xff]
    %v662 = vld [vmem:[#allocation6 + $0x350] sm:$0xff]
    %v663 = vld [vmem:[#allocation6 + $0x358] sm:$0xff]
    %v664 = vld [vmem:[#allocation6 + $0x360] sm:$0xff]
    %v665 = vld [vmem:[#allocation6 + $0x368] sm:$0xff]
    %v666 = vld [vmem:[#allocation6 + $0x370] sm:$0xff]
    %v667 = vld [vmem:[#allocation6 + $0x378] sm:$0xff]
    %v668 = vld [vmem:[#allocation6 + $0x380] sm:$0xff]
    %v669 = vld [vmem:[#allocation6 + $0x388] sm:$0xff]
    %v670 = vld [vmem:[#allocation6 + $0x390] sm:$0xff]
    %v671 = vld [vmem:[#allocation6 + $0x398] sm:$0xff]
    %v672 = vld [vmem:[#allocation6 + $0x3a0] sm:$0xff]
    %v673 = vld [vmem:[#allocation6 + $0x3a8] sm:$0xff]
    %s674 = scalar_lea.vmem [#allocation6], 944
    %v675 = vld [vmem:[%s674] ss:$8 sm:$0x3]
    %v677 = vlaneseq
    %v678 = vshrl.u32 %v677, 7
    %v679 = vsub.s32 0, %v678
    %v680 = vrot.slane %v675, %v679
    %v681 = vlaneseq
    %v682 = vshrl.u32 %v681, 7
    %v683 = vsub.s32 1, %v682
    %v684 = vrot.slane %v675, %v683
    %687 = vmatprep.subr.mxu0 %v611
    %688 = vmatpush1.msra.mxu0 %v610
    %689 = vmatprep.subr.mxu0 %v613
    %690 = vmatpush1.msra.mxu0 %v612
    %691 = vmatprep.subr.mxu0 %v615
    %692 = vmatpush1.msra.mxu0 %v614
    %693 = vmatprep.subr.mxu0 %v617
    %694 = vmatpush1.msra.mxu0 %v616
    %695 = vmatprep.subr.mxu0 %v619
    %696 = vmatpush1.msra.mxu0 %v618
    %697 = vmatprep.subr.mxu0 %v621
    %698 = vmatpush1.msra.mxu0 %v620
    %699 = vmatprep.subr.mxu0 %v623
    %700 = vmatpush1.msra.mxu0 %v622
    %701 = vmatprep.subr.mxu0 %v625
    %702 = vmatpush1.msra.mxu0 %v624
    %703 = vmatprep.subr.mxu0 %v627
    %704 = vmatpush1.msra.mxu0 %v626
    %705 = vmatprep.subr.mxu0 %v629
    %706 = vmatpush1.msra.mxu0 %v628
    %707 = vmatprep.subr.mxu0 %v631
    %708 = vmatpush1.msra.mxu0 %v630
    %709 = vmatprep.subr.mxu0 %v633
    %710 = vmatpush1.msra.mxu0 %v632
    %711 = vmatprep.subr.mxu0 %v635
    %712 = vmatpush1.msra.mxu0 %v634
    %713 = vmatprep.subr.mxu0 %v637
    %714 = vmatpush1.msra.mxu0 %v636
    %715 = vmatprep.subr.mxu0 %v639
    %716 = vmatpush1.msra.mxu0 %v638
    %717 = vmatprep.subr.mxu0 %v641
    %718 = vmatpush1.msra.mxu0 %v640
    %719 = vmatprep.subr.mxu0 %v643
    %720 = vmatpush1.msra.mxu0 %v642
    %721 = vmatprep.subr.mxu0 %v645
    %722 = vmatpush1.msra.mxu0 %v644
    %723 = vmatprep.subr.mxu0 %v647
    %724 = vmatpush1.msra.mxu0 %v646
    %725 = vmatprep.subr.mxu0 %v649
    %726 = vmatpush1.msra.mxu0 %v648
    %727 = vmatprep.subr.mxu0 %v651
    %728 = vmatpush1.msra.mxu0 %v650
    %729 = vmatprep.subr.mxu0 %v653
    %730 = vmatpush1.msra.mxu0 %v652
    %731 = vmatprep.subr.mxu0 %v655
    %732 = vmatpush1.msra.mxu0 %v654
    %733 = vmatprep.subr.mxu0 %v657
    %734 = vmatpush1.msra.mxu0 %v656
    %735 = vmatprep.subr.mxu0 %v659
    %736 = vmatpush1.msra.mxu0 %v658
    %737 = vmatprep.subr.mxu0 %v661
    %738 = vmatpush1.msra.mxu0 %v660
    %739 = vmatprep.subr.mxu0 %v663
    %740 = vmatpush1.msra.mxu0 %v662
    %741 = vmatprep.subr.mxu0 %v665
    %742 = vmatpush1.msra.mxu0 %v664
    %743 = vmatprep.subr.mxu0 %v667
    %744 = vmatpush1.msra.mxu0 %v666
    %745 = vmatprep.subr.mxu0 %v669
    %746 = vmatpush1.msra.mxu0 %v668
    %747 = vmatprep.subr.mxu0 %v671
    %748 = vmatpush1.msra.mxu0 %v670
    %749 = vmatprep.subr.mxu0 %v673
    %750 = vmatpush1.msra.mxu0 %v672
    %751 = vmatprep.mubr.f32.mxu0 %v595
    %752 = vmatmul.mubr.f32.gmra.mrb[0].mxu0 %v594
    %v753 = vpop.f32.mrb[0].mxu0
    %v754 = vadd.f32 %v680, %v753
    %v755 = vpop.f32.mrb[0].mxu0
    %v756 = vadd.f32 %v684, %v755
    %757 = vmatprep.mubr.f32.mxu0 %v597
    %758 = vmatmul.mubr.f32.gmra.mrb[0].mxu0 %v596
    %v759 = vpop.f32.mrb[0].mxu0
    %v760 = vadd.f32 %v680, %v759
    %v761 = vpop.f32.mrb[0].mxu0
    %v762 = vadd.f32 %v684, %v761
    %763 = vmatprep.mubr.f32.mxu0 %v599
    %764 = vmatmul.mubr.f32.gmra.mrb[0].mxu0 %v598
    %v765 = vpop.f32.mrb[0].mxu0
    %v766 = vadd.f32 %v680, %v765
    %v767 = vpop.f32.mrb[0].mxu0
    %v768 = vadd.f32 %v684, %v767
    %769 = vmatprep.mubr.f32.mxu0 %v601
    %770 = vmatmul.mubr.f32.gmra.mrb[0].mxu0 %v600
    %v771 = vpop.f32.mrb[0].mxu0
    %v772 = vadd.f32 %v680, %v771
    %v773 = vpop.f32.mrb[0].mxu0
    %v774 = vadd.f32 %v684, %v773
    %775 = vmatprep.mubr.f32.mxu0 %v603
    %776 = vmatmul.mubr.f32.gmra.mrb[0].mxu0 %v602
    %v777 = vpop.f32.mrb[0].mxu0
    %v778 = vadd.f32 %v680, %v777
    %v779 = vpop.f32.mrb[0].mxu0
    %v780 = vadd.f32 %v684, %v779
    %781 = vmatprep.mubr.f32.mxu0 %v605
    %782 = vmatmul.mubr.f32.gmra.mrb[0].mxu0 %v604
    %v783 = vpop.f32.mrb[0].mxu0
    %v784 = vadd.f32 %v680, %v783
    %v785 = vpop.f32.mrb[0].mxu0
    %v786 = vadd.f32 %v684, %v785
    %787 = vmatprep.mubr.f32.mxu0 %v607
    %788 = vmatmul.mubr.f32.gmra.mrb[0].mxu0 %v606
    %v789 = vpop.f32.mrb[0].mxu0
    %v790 = vadd.f32 %v680, %v789
    %v791 = vpop.f32.mrb[0].mxu0
    %v792 = vadd.f32 %v684, %v791
    %793 = vmatprep.mubr.f32.mxu0 %v609
    %794 = vmatmul.mubr.f32.gmra.mrb[0].mxu0 %v608
    %v795 = vpop.f32.mrb[0].mxu0
    %v796 = vadd.f32 %v680, %v795
    %v797 = vpop.f32.mrb[0].mxu0
    %v798 = vadd.f32 %v684, %v797
    %799 = vdwg.mxu0
    %v800 = vmax.f32 %v754, 0.0
    %v801 = vmax.f32 %v756, 0.0
    %v802 = vmax.f32 %v760, 0.0
    %v803 = vmax.f32 %v762, 0.0
    %v804 = vmax.f32 %v766, 0.0
    %v805 = vmax.f32 %v768, 0.0
    %v806 = vmax.f32 %v772, 0.0
    %v807 = vmax.f32 %v774, 0.0
    %v808 = vmax.f32 %v778, 0.0
    %v809 = vmax.f32 %v780, 0.0
    %v810 = vmax.f32 %v784, 0.0
    %v811 = vmax.f32 %v786, 0.0
    %v812 = vmax.f32 %v790, 0.0
    %v813 = vmax.f32 %v792, 0.0
    %v814 = vmax.f32 %v796, 0.0
    %v815 = vmax.f32 %v798, 0.0
    %s816 = scalar_lea.vmem [#allocation4], 64
    %v817 = vld [vmem:[%s816] sm:$0xff]
    %v818 = vld [vmem:[%s816 + $0x8] sm:$0xff]
    %v819 = vld [vmem:[%s816 + $0x10] sm:$0xff]
    %v820 = vld [vmem:[%s816 + $0x18] sm:$0xff]
    %v821 = vld [vmem:[%s816 + $0x20] sm:$0xff]
    %v822 = vld [vmem:[%s816 + $0x28] sm:$0xff]
    %v823 = vld [vmem:[%s816 + $0x30] sm:$0xff]
    %v824 = vld [vmem:[%s816 + $0x38] sm:$0xff]
    %v826 = vsel %vm79, %v817, 0
    %v829 = vsel %vm79, %v818, 0
    %v832 = vsel %vm79, %v819, 0
    %v835 = vsel %vm79, %v820, 0
    %v838 = vsel %vm79, %v821, 0
    %v841 = vsel %vm79, %v822, 0
    %v844 = vsel %vm79, %v823, 0
    %v847 = vsel %vm79, %v824, 0
    %849 = vmatprep.subr.mxu0 %v801
    %850 = vmatpush1.msra.mxu0 %v800
    %851 = vmatprep.subr.mxu0 %v803
    %852 = vmatpush1.msra.mxu0 %v802
    %853 = vmatprep.subr.mxu0 %v805
    %854 = vmatpush1.msra.mxu0 %v804
    %855 = vmatprep.subr.mxu0 %v807
    %856 = vmatpush1.msra.mxu0 %v806
    %857 = vmatprep.subr.mxu0 %v809
    %858 = vmatpush1.msra.mxu0 %v808
    %859 = vmatprep.subr.mxu0 %v811
    %860 = vmatpush1.msra.mxu0 %v810
    %861 = vmatprep.subr.mxu0 %v813
    %862 = vmatpush1.msra.mxu0 %v812
    %863 = vmatprep.subr.mxu0 %v815
    %864 = vmatpush1.msra.mxu0 %v814
    %865 = vmatprep.subr.mxu0 0.0
    %866 = vmatpush1.msra.mxu0 0.0
    %867 = vmatprep.subr.mxu0 0.0
    %868 = vmatpush1.msra.mxu0 0.0
    %869 = vmatprep.subr.mxu0 0.0
    %870 = vmatpush1.msra.mxu0 0.0
    %871 = vmatprep.subr.mxu0 0.0
    %872 = vmatpush1.msra.mxu0 0.0
    %873 = vmatprep.subr.mxu0 0.0
    %874 = vmatpush1.msra.mxu0 0.0
    %875 = vmatprep.subr.mxu0 0.0
    %876 = vmatpush1.msra.mxu0 0.0
    %877 = vmatprep.subr.mxu0 0.0
    %878 = vmatpush1.msra.mxu0 0.0
    %879 = vmatprep.subr.mxu0 0.0
    %880 = vmatpush1.msra.mxu0 0.0
    %881 = vmatprep.subr.mxu0 0.0
    %882 = vmatpush1.msra.mxu0 0.0
    %883 = vmatprep.subr.mxu0 0.0
    %884 = vmatpush1.msra.mxu0 0.0
    %885 = vmatprep.subr.mxu0 0.0
    %886 = vmatpush1.msra.mxu0 0.0
    %887 = vmatprep.subr.mxu0 0.0
    %888 = vmatpush1.msra.mxu0 0.0
    %889 = vmatprep.subr.mxu0 0.0
    %890 = vmatpush1.msra.mxu0 0.0
    %891 = vmatprep.subr.mxu0 0.0
    %892 = vmatpush1.msra.mxu0 0.0
    %893 = vmatprep.subr.mxu0 0.0
    %894 = vmatpush1.msra.mxu0 0.0
    %895 = vmatprep.subr.mxu0 0.0
    %896 = vmatpush1.msra.mxu0 0.0
    %897 = vmatprep.subr.mxu0 0.0
    %898 = vmatpush1.msra.mxu0 0.0
    %899 = vmatprep.subr.mxu0 0.0
    %900 = vmatpush1.msra.mxu0 0.0
    %901 = vmatprep.subr.mxu0 0.0
    %902 = vmatpush1.msra.mxu0 0.0
    %903 = vmatprep.subr.mxu0 0.0
    %904 = vmatpush1.msra.mxu0 0.0
    %905 = vmatprep.subr.mxu0 0.0
    %906 = vmatpush1.msra.mxu0 0.0
    %907 = vmatprep.subr.mxu0 0.0
    %908 = vmatpush1.msra.mxu0 0.0
    %909 = vmatprep.subr.mxu0 0.0
    %910 = vmatpush1.msra.mxu0 0.0
    %911 = vmatprep.subr.mxu0 0.0
    %912 = vmatpush1.msra.mxu0 0.0
    %913 = vmatprep.mubr.f32.mxu0 0.0
    %914 = vmatmul.mubr.f32.gmra.mrb[0].mxu0 %v826
    %v915 = vpop.f32.mrb[0].mxu0
    %v916 = vadd.f32 0.0, %v915
    %v917 = vpop.f32.mrb[0].mxu0
    %v918 = vadd.f32 0.0, %v917
    %919 = vmatprep.mubr.f32.mxu0 0.0
    %920 = vmatmul.mubr.f32.gmra.mrb[0].mxu0 %v829
    %v921 = vpop.f32.mrb[0].mxu0
    %v922 = vadd.f32 0.0, %v921
    %v923 = vpop.f32.mrb[0].mxu0
    %v924 = vadd.f32 0.0, %v923
    %925 = vmatprep.mubr.f32.mxu0 0.0
    %926 = vmatmul.mubr.f32.gmra.mrb[0].mxu0 %v832
    %v927 = vpop.f32.mrb[0].mxu0
    %v928 = vadd.f32 0.0, %v927
    %v929 = vpop.f32.mrb[0].mxu0
    %v930 = vadd.f32 0.0, %v929
    %931 = vmatprep.mubr.f32.mxu0 0.0
    %932 = vmatmul.mubr.f32.gmra.mrb[0].mxu0 %v835
    %v933 = vpop.f32.mrb[0].mxu0
    %v934 = vadd.f32 0.0, %v933
    %v935 = vpop.f32.mrb[0].mxu0
    %v936 = vadd.f32 0.0, %v935
    %937 = vmatprep.mubr.f32.mxu0 0.0
    %938 = vmatmul.mubr.f32.gmra.mrb[0].mxu0 %v838
    %v939 = vpop.f32.mrb[0].mxu0
    %v940 = vadd.f32 0.0, %v939
    %v941 = vpop.f32.mrb[0].mxu0
    %v942 = vadd.f32 0.0, %v941
    %943 = vmatprep.mubr.f32.mxu0 0.0
    %944 = vmatmul.mubr.f32.gmra.mrb[0].mxu0 %v841
    %v945 = vpop.f32.mrb[0].mxu0
    %v946 = vadd.f32 0.0, %v945
    %v947 = vpop.f32.mrb[0].mxu0
    %v948 = vadd.f32 0.0, %v947
    %949 = vmatprep.mubr.f32.mxu0 0.0
    %950 = vmatmul.mubr.f32.gmra.mrb[0].mxu0 %v844
    %v951 = vpop.f32.mrb[0].mxu0
    %v952 = vadd.f32 0.0, %v951
    %v953 = vpop.f32.mrb[0].mxu0
    %v954 = vadd.f32 0.0, %v953
    %955 = vmatprep.mubr.f32.mxu0 0.0
    %956 = vmatmul.mubr.f32.gmra.mrb[0].mxu0 %v847
    %v957 = vpop.f32.mrb[0].mxu0
    %v958 = vadd.f32 0.0, %v957
    %v959 = vpop.f32.mrb[0].mxu0
    %v960 = vadd.f32 0.0, %v959
    %961 = vdwg.mxu0
    %s962 = scalar_lea.vmem [#allocation4], 128
    %v963 = vld [vmem:[%s962] sm:$0xff]
    %v964 = vld [vmem:[%s962 + $0x8] sm:$0xff]
    %v965 = vld [vmem:[%s962 + $0x10] sm:$0xff]
    %v966 = vld [vmem:[%s962 + $0x18] sm:$0xff]
    %v967 = vld [vmem:[%s962 + $0x20] sm:$0xff]
    %v968 = vld [vmem:[%s962 + $0x28] sm:$0xff]
    %v969 = vld [vmem:[%s962 + $0x30] sm:$0xff]
    %v970 = vld [vmem:[%s962 + $0x38] sm:$0xff]
    %v972 = vsel %vm79, %v963, 0
    %v975 = vsel %vm79, %v964, 0
    %v978 = vsel %vm79, %v965, 0
    %v981 = vsel %vm79, %v966, 0
    %v984 = vsel %vm79, %v967, 0
    %v987 = vsel %vm79, %v968, 0
    %v990 = vsel %vm79, %v969, 0
    %v993 = vsel %vm79, %v970, 0
    %995 = vmatprep.subr.mxu0 %v918
    %996 = vmatpush1.msra.mxu0 %v916
    %997 = vmatprep.subr.mxu0 %v924
    %998 = vmatpush1.msra.mxu0 %v922
    %999 = vmatprep.subr.mxu0 %v930
    %1000 = vmatpush1.msra.mxu0 %v928
    %1001 = vmatprep.subr.mxu0 %v936
    %1002 = vmatpush1.msra.mxu0 %v934
    %1003 = vmatprep.subr.mxu0 %v942
    %1004 = vmatpush1.msra.mxu0 %v940
    %1005 = vmatprep.subr.mxu0 %v948
    %1006 = vmatpush1.msra.mxu0 %v946
    %1007 = vmatprep.subr.mxu0 %v954
    %1008 = vmatpush1.msra.mxu0 %v952
    %1009 = vmatprep.subr.mxu0 %v960
    %1010 = vmatpush1.msra.mxu0 %v958
    %1011 = vmatprep.subr.mxu0 0.0
    %1012 = vmatpush1.msra.mxu0 0.0
    %1013 = vmatprep.subr.mxu0 0.0
    %1014 = vmatpush1.msra.mxu0 0.0
    %1015 = vmatprep.subr.mxu0 0.0
    %1016 = vmatpush1.msra.mxu0 0.0
    %1017 = vmatprep.subr.mxu0 0.0
    %1018 = vmatpush1.msra.mxu0 0.0
    %1019 = vmatprep.subr.mxu0 0.0
    %1020 = vmatpush1.msra.mxu0 0.0
    %1021 = vmatprep.subr.mxu0 0.0
    %1022 = vmatpush1.msra.mxu0 0.0
    %1023 = vmatprep.subr.mxu0 0.0
    %1024 = vmatpush1.msra.mxu0 0.0
    %1025 = vmatprep.subr.mxu0 0.0
    %1026 = vmatpush1.msra.mxu0 0.0
    %1027 = vmatprep.subr.mxu0 0.0
    %1028 = vmatpush1.msra.mxu0 0.0
    %1029 = vmatprep.subr.mxu0 0.0
    %1030 = vmatpush1.msra.mxu0 0.0
    %1031 = vmatprep.subr.mxu0 0.0
    %1032 = vmatpush1.msra.mxu0 0.0
    %1033 = vmatprep.subr.mxu0 0.0
    %1034 = vmatpush1.msra.mxu0 0.0
    %1035 = vmatprep.subr.mxu0 0.0
    %1036 = vmatpush1.msra.mxu0 0.0
    %1037 = vmatprep.subr.mxu0 0.0
    %1038 = vmatpush1.msra.mxu0 0.0
    %1039 = vmatprep.subr.mxu0 0.0
    %1040 = vmatpush1.msra.mxu0 0.0
    %1041 = vmatprep.subr.mxu0 0.0
    %1042 = vmatpush1.msra.mxu0 0.0
    %1043 = vmatprep.subr.mxu0 0.0
    %1044 = vmatpush1.msra.mxu0 0.0
    %1045 = vmatprep.subr.mxu0 0.0
    %1046 = vmatpush1.msra.mxu0 0.0
    %1047 = vmatprep.subr.mxu0 0.0
    %1048 = vmatpush1.msra.mxu0 0.0
    %1049 = vmatprep.subr.mxu0 0.0
    %1050 = vmatpush1.msra.mxu0 0.0
    %1051 = vmatprep.subr.mxu0 0.0
    %1052 = vmatpush1.msra.mxu0 0.0
    %1053 = vmatprep.subr.mxu0 0.0
    %1054 = vmatpush1.msra.mxu0 0.0
    %1055 = vmatprep.subr.mxu0 0.0
    %1056 = vmatpush1.msra.mxu0 0.0
    %1057 = vmatprep.subr.mxu0 0.0
    %1058 = vmatpush1.msra.mxu0 0.0
    %1059 = vmatprep.mubr.f32.mxu0 0.0
    %1060 = vmatmul.mubr.f32.gmra.mrb[0].mxu0 %v972
    %v1061 = vpop.f32.mrb[0].mxu0
    %v1062 = vadd.f32 0.0, %v1061
    %v1063 = vpop.f32.mrb[0].mxu0
    %v1064 = vadd.f32 0.0, %v1063
    %1065 = vmatprep.mubr.f32.mxu0 0.0
    %1066 = vmatmul.mubr.f32.gmra.mrb[0].mxu0 %v975
    %v1067 = vpop.f32.mrb[0].mxu0
    %v1068 = vadd.f32 0.0, %v1067
    %v1069 = vpop.f32.mrb[0].mxu0
    %v1070 = vadd.f32 0.0, %v1069
    %1071 = vmatprep.mubr.f32.mxu0 0.0
    %1072 = vmatmul.mubr.f32.gmra.mrb[0].mxu0 %v978
    %v1073 = vpop.f32.mrb[0].mxu0
    %v1074 = vadd.f32 0.0, %v1073
    %v1075 = vpop.f32.mrb[0].mxu0
    %v1076 = vadd.f32 0.0, %v1075
    %1077 = vmatprep.mubr.f32.mxu0 0.0
    %1078 = vmatmul.mubr.f32.gmra.mrb[0].mxu0 %v981
    %v1079 = vpop.f32.mrb[0].mxu0
    %v1080 = vadd.f32 0.0, %v1079
    %v1081 = vpop.f32.mrb[0].mxu0
    %v1082 = vadd.f32 0.0, %v1081
    %1083 = vmatprep.mubr.f32.mxu0 0.0
    %1084 = vmatmul.mubr.f32.gmra.mrb[0].mxu0 %v984
    %v1085 = vpop.f32.mrb[0].mxu0
    %v1086 = vadd.f32 0.0, %v1085
    %v1087 = vpop.f32.mrb[0].mxu0
    %v1088 = vadd.f32 0.0, %v1087
    %1089 = vmatprep.mubr.f32.mxu0 0.0
    %1090 = vmatmul.mubr.f32.gmra.mrb[0].mxu0 %v987
    %v1091 = vpop.f32.mrb[0].mxu0
    %v1092 = vadd.f32 0.0, %v1091
    %v1093 = vpop.f32.mrb[0].mxu0
    %v1094 = vadd.f32 0.0, %v1093
    %1095 = vmatprep.mubr.f32.mxu0 0.0
    %1096 = vmatmul.mubr.f32.gmra.mrb[0].mxu0 %v990
    %v1097 = vpop.f32.mrb[0].mxu0
    %v1098 = vadd.f32 0.0, %v1097
    %v1099 = vpop.f32.mrb[0].mxu0
    %v1100 = vadd.f32 0.0, %v1099
    %1101 = vmatprep.mubr.f32.mxu0 0.0
    %1102 = vmatmul.mubr.f32.gmra.mrb[0].mxu0 %v993
    %v1103 = vpop.f32.mrb[0].mxu0
    %v1104 = vadd.f32 0.0, %v1103
    %v1105 = vpop.f32.mrb[0].mxu0
    %v1106 = vadd.f32 0.0, %v1105
    %1107 = vdwg.mxu0
    %1108 = vset.pattern.permute.xlu0 2
    %1109 = vperm.xlu0 %1108, %v61
    %v1110 = vpop.permute.xlu0 %1109
    %v1112 = vmul.f32 %v1110, %v916
    %v1113 = vmul.f32 %v1110, %v918
    %v1114 = vmul.f32 %v1110, %v922
    %v1115 = vmul.f32 %v1110, %v924
    %v1116 = vmul.f32 %v1110, %v928
    %v1117 = vmul.f32 %v1110, %v930
    %v1118 = vmul.f32 %v1110, %v934
    %v1119 = vmul.f32 %v1110, %v936
    %v1120 = vmul.f32 %v1110, %v940
    %v1121 = vmul.f32 %v1110, %v942
    %v1122 = vmul.f32 %v1110, %v946
    %v1123 = vmul.f32 %v1110, %v948
    %v1124 = vmul.f32 %v1110, %v952
    %v1125 = vmul.f32 %v1110, %v954
    %v1126 = vmul.f32 %v1110, %v958
    %v1127 = vmul.f32 %v1110, %v960
    %1128 = vset.pattern.permute.xlu0 3
    %1129 = vperm.xlu0 %1128, %v61
    %v1130 = vpop.permute.xlu0 %1129
    %v1132 = vmul.f32 %v1130, %v1062
    %v1133 = vmul.f32 %v1130, %v1064
    %v1134 = vmul.f32 %v1130, %v1068
    %v1135 = vmul.f32 %v1130, %v1070
    %v1136 = vmul.f32 %v1130, %v1074
    %v1137 = vmul.f32 %v1130, %v1076
    %v1138 = vmul.f32 %v1130, %v1080
    %v1139 = vmul.f32 %v1130, %v1082
    %v1140 = vmul.f32 %v1130, %v1086
    %v1141 = vmul.f32 %v1130, %v1088
    %v1142 = vmul.f32 %v1130, %v1092
    %v1143 = vmul.f32 %v1130, %v1094
    %v1144 = vmul.f32 %v1130, %v1098
    %v1145 = vmul.f32 %v1130, %v1100
    %v1146 = vmul.f32 %v1130, %v1104
    %v1147 = vmul.f32 %v1130, %v1106
    %v1148 = vadd.f32 %v1112, %v1132
    %v1149 = vadd.f32 %v1113, %v1133
    %v1150 = vadd.f32 %v1114, %v1134
    %v1151 = vadd.f32 %v1115, %v1135
    %v1152 = vadd.f32 %v1116, %v1136
    %v1153 = vadd.f32 %v1117, %v1137
    %v1154 = vadd.f32 %v1118, %v1138
    %v1155 = vadd.f32 %v1119, %v1139
    %v1156 = vadd.f32 %v1120, %v1140
    %v1157 = vadd.f32 %v1121, %v1141
    %v1158 = vadd.f32 %v1122, %v1142
    %v1159 = vadd.f32 %v1123, %v1143
    %v1160 = vadd.f32 %v1124, %v1144
    %v1161 = vadd.f32 %v1125, %v1145
    %v1162 = vadd.f32 %v1126, %v1146
    %v1163 = vadd.f32 %v1127, %v1147
    %v1164 = vld [vmem:[#allocation6 + $0x5d0] sm:$0xff]
    %v1165 = vld [vmem:[#allocation6 + $0x5e0] sm:$0xff]
    %v1166 = vld [vmem:[#allocation6 + $0x5f0] sm:$0xff]
    %v1167 = vld [vmem:[#allocation6 + $0x600] sm:$0xff]
    %v1168 = vld [vmem:[#allocation6 + $0x610] sm:$0xff]
    %v1169 = vld [vmem:[#allocation6 + $0x620] sm:$0xff]
    %v1170 = vld [vmem:[#allocation6 + $0x630] sm:$0xff]
    %v1171 = vld [vmem:[#allocation6 + $0x640] sm:$0xff]
    %v1172 = vld [vmem:[#allocation6 + $0x650] sm:$0xff]
    %v1173 = vld [vmem:[#allocation6 + $0x660] sm:$0xff]
    %v1174 = vld [vmem:[#allocation6 + $0x670] sm:$0xff]
    %v1175 = vld [vmem:[#allocation6 + $0x680] sm:$0xff]
    %v1176 = vld [vmem:[#allocation6 + $0x690] sm:$0xff]
    %v1177 = vld [vmem:[#allocation6 + $0x6a0] sm:$0xff]
    %v1178 = vld [vmem:[#allocation6 + $0x6b0] sm:$0xff]
    %v1179 = vld [vmem:[#allocation6 + $0x6c0] sm:$0xff]
    %v1180 = vld [vmem:[#allocation6 + $0x6d0] sm:$0xff]
    %v1181 = vld [vmem:[#allocation6 + $0x6e0] sm:$0xff]
    %v1182 = vld [vmem:[#allocation6 + $0x6f0] sm:$0xff]
    %v1183 = vld [vmem:[#allocation6 + $0x700] sm:$0xff]
    %v1184 = vld [vmem:[#allocation6 + $0x710] sm:$0xff]
    %v1185 = vld [vmem:[#allocation6 + $0x720] sm:$0xff]
    %v1186 = vld [vmem:[#allocation6 + $0x730] sm:$0xff]
    %v1187 = vld [vmem:[#allocation6 + $0x740] sm:$0xff]
    %v1188 = vld [vmem:[#allocation6 + $0x750] sm:$0xff]
    %v1189 = vld [vmem:[#allocation6 + $0x760] sm:$0xff]
    %v1190 = vld [vmem:[#allocation6 + $0x770] sm:$0xff]
    %v1191 = vld [vmem:[#allocation6 + $0x780] sm:$0xff]
    %v1192 = vld [vmem:[#allocation6 + $0x790] sm:$0xff]
    %v1193 = vld [vmem:[#allocation6 + $0x7a0] sm:$0xff]
    %v1194 = vld [vmem:[#allocation6 + $0x7b0] sm:$0xff]
    %v1195 = vld [vmem:[#allocation6 + $0x7c0] sm:$0xff]
    %v1196 = vld [vmem:[#allocation6 + $0x7d0] ss:$0 sm:$0xff]
    %1197 = vmatprep.subr.mxu0 0.0
    %1198 = vmatpush1.msra.mxu0 %v1164
    %1199 = vmatprep.subr.mxu0 0.0
    %1200 = vmatpush1.msra.mxu0 %v1165
    %1201 = vmatprep.subr.mxu0 0.0
    %1202 = vmatpush1.msra.mxu0 %v1166
    %1203 = vmatprep.subr.mxu0 0.0
    %1204 = vmatpush1.msra.mxu0 %v1167
    %1205 = vmatprep.subr.mxu0 0.0
    %1206 = vmatpush1.msra.mxu0 %v1168
    %1207 = vmatprep.subr.mxu0 0.0
    %1208 = vmatpush1.msra.mxu0 %v1169
    %1209 = vmatprep.subr.mxu0 0.0
    %1210 = vmatpush1.msra.mxu0 %v1170
    %1211 = vmatprep.subr.mxu0 0.0
    %1212 = vmatpush1.msra.mxu0 %v1171
    %1213 = vmatprep.subr.mxu0 0.0
    %1214 = vmatpush1.msra.mxu0 %v1172
    %1215 = vmatprep.subr.mxu0 0.0
    %1216 = vmatpush1.msra.mxu0 %v1173
    %1217 = vmatprep.subr.mxu0 0.0
    %1218 = vmatpush1.msra.mxu0 %v1174
    %1219 = vmatprep.subr.mxu0 0.0
    %1220 = vmatpush1.msra.mxu0 %v1175
    %1221 = vmatprep.subr.mxu0 0.0
    %1222 = vmatpush1.msra.mxu0 %v1176
    %1223 = vmatprep.subr.mxu0 0.0
    %1224 = vmatpush1.msra.mxu0 %v1177
    %1225 = vmatprep.subr.mxu0 0.0
    %1226 = vmatpush1.msra.mxu0 %v1178
    %1227 = vmatprep.subr.mxu0 0.0
    %1228 = vmatpush1.msra.mxu0 %v1179
    %1229 = vmatprep.subr.mxu0 0.0
    %1230 = vmatpush1.msra.mxu0 %v1180
    %1231 = vmatprep.subr.mxu0 0.0
    %1232 = vmatpush1.msra.mxu0 %v1181
    %1233 = vmatprep.subr.mxu0 0.0
    %1234 = vmatpush1.msra.mxu0 %v1182
    %1235 = vmatprep.subr.mxu0 0.0
    %1236 = vmatpush1.msra.mxu0 %v1183
    %1237 = vmatprep.subr.mxu0 0.0
    %1238 = vmatpush1.msra.mxu0 %v1184
    %1239 = vmatprep.subr.mxu0 0.0
    %1240 = vmatpush1.msra.mxu0 %v1185
    %1241 = vmatprep.subr.mxu0 0.0
    %1242 = vmatpush1.msra.mxu0 %v1186
    %1243 = vmatprep.subr.mxu0 0.0
    %1244 = vmatpush1.msra.mxu0 %v1187
    %1245 = vmatprep.subr.mxu0 0.0
    %1246 = vmatpush1.msra.mxu0 %v1188
    %1247 = vmatprep.subr.mxu0 0.0
    %1248 = vmatpush1.msra.mxu0 %v1189
    %1249 = vmatprep.subr.mxu0 0.0
    %1250 = vmatpush1.msra.mxu0 %v1190
    %1251 = vmatprep.subr.mxu0 0.0
    %1252 = vmatpush1.msra.mxu0 %v1191
    %1253 = vmatprep.subr.mxu0 0.0
    %1254 = vmatpush1.msra.mxu0 %v1192
    %1255 = vmatprep.subr.mxu0 0.0
    %1256 = vmatpush1.msra.mxu0 %v1193
    %1257 = vmatprep.subr.mxu0 0.0
    %1258 = vmatpush1.msra.mxu0 %v1194
    %1259 = vmatprep.subr.mxu0 0.0
    %1260 = vmatpush1.msra.mxu0 %v1195
    %1261 = vmatprep.mubr.f32.mxu0 %v1149
    %1262 = vmatmul.mubr.f32.gmra.mrb[0].mxu0 %v1148
    %v1263 = vpop.f32.mrb[0].mxu0
    %v1264 = vadd.f32 %v1196, %v1263
    %v1265 = vpop.f32.mrb[0].mxu0
    %1266 = vmatprep.mubr.f32.mxu0 %v1151
    %1267 = vmatmul.mubr.f32.gmra.mrb[0].mxu0 %v1150
    %v1268 = vpop.f32.mrb[0].mxu0
    %v1269 = vadd.f32 %v1196, %v1268
    %v1270 = vpop.f32.mrb[0].mxu0
    %1271 = vmatprep.mubr.f32.mxu0 %v1153
    %1272 = vmatmul.mubr.f32.gmra.mrb[0].mxu0 %v1152
    %v1273 = vpop.f32.mrb[0].mxu0
    %v1274 = vadd.f32 %v1196, %v1273
    %v1275 = vpop.f32.mrb[0].mxu0
    %1276 = vmatprep.mubr.f32.mxu0 %v1155
    %1277 = vmatmul.mubr.f32.gmra.mrb[0].mxu0 %v1154
    %v1278 = vpop.f32.mrb[0].mxu0
    %v1279 = vadd.f32 %v1196, %v1278
    %v1280 = vpop.f32.mrb[0].mxu0
    %1281 = vmatprep.mubr.f32.mxu0 %v1157
    %1282 = vmatmul.mubr.f32.gmra.mrb[0].mxu0 %v1156
    %v1283 = vpop.f32.mrb[0].mxu0
    %v1284 = vadd.f32 %v1196, %v1283
    %v1285 = vpop.f32.mrb[0].mxu0
    %1286 = vmatprep.mubr.f32.mxu0 %v1159
    %1287 = vmatmul.mubr.f32.gmra.mrb[0].mxu0 %v1158
    %v1288 = vpop.f32.mrb[0].mxu0
    %v1289 = vadd.f32 %v1196, %v1288
    %v1290 = vpop.f32.mrb[0].mxu0
    %1291 = vmatprep.mubr.f32.mxu0 %v1161
    %1292 = vmatmul.mubr.f32.gmra.mrb[0].mxu0 %v1160
    %v1293 = vpop.f32.mrb[0].mxu0
    %v1294 = vadd.f32 %v1196, %v1293
    %v1295 = vpop.f32.mrb[0].mxu0
    %1296 = vmatprep.mubr.f32.mxu0 %v1163
    %1297 = vmatmul.mubr.f32.gmra.mrb[0].mxu0 %v1162
    %v1298 = vpop.f32.mrb[0].mxu0
    %v1299 = vadd.f32 %v1196, %v1298
    %v1300 = vpop.f32.mrb[0].mxu0
    %1301 = vdwg.mxu0
    %vm1302 = vcmask 64512
    %v1303 = vsel %vm1302, %v1264, -inf
    %1304 = vmax.xlane.f32.xlu0 %v1303
    %v1305 = vpop.xlane.xlu0 %1304
    %v1306 = vsel %vm1302, %v1269, -inf
    %1307 = vmax.xlane.f32.xlu0 %v1306
    %v1308 = vpop.xlane.xlu0 %1307
    %v1309 = vsel %vm1302, %v1274, -inf
    %1310 = vmax.xlane.f32.xlu0 %v1309
    %v1311 = vpop.xlane.xlu0 %1310
    %v1312 = vsel %vm1302, %v1279, -inf
    %1313 = vmax.xlane.f32.xlu0 %v1312
    %v1314 = vpop.xlane.xlu0 %1313
    %v1315 = vsel %vm1302, %v1284, -inf
    %1316 = vmax.xlane.f32.xlu0 %v1315
    %v1317 = vpop.xlane.xlu0 %1316
    %v1318 = vsel %vm1302, %v1289, -inf
    %1319 = vmax.xlane.f32.xlu0 %v1318
    %v1320 = vpop.xlane.xlu0 %1319
    %v1321 = vsel %vm1302, %v1294, -inf
    %1322 = vmax.xlane.f32.xlu0 %v1321
    %v1323 = vpop.xlane.xlu0 %1322
    %v1324 = vsel %vm1302, %v1299, -inf
    %1325 = vmax.xlane.f32.xlu0 %v1324
    %v1326 = vpop.xlane.xlu0 %1325
    %v1327 = vsub.f32 %v1264, %v1305
    %v1328 = vsub.f32 %v1269, %v1308
    %v1329 = vsub.f32 %v1274, %v1311
    %v1330 = vsub.f32 %v1279, %v1314
    %v1331 = vsub.f32 %v1284, %v1317
    %v1332 = vsub.f32 %v1289, %v1320
    %v1333 = vsub.f32 %v1294, %v1323
    %v1334 = vsub.f32 %v1299, %v1326
    %v1335 = vmul.f32 %v1327, 1.442695
    %v1336 = vpow.pop %v1335
    %v1337 = vmul.f32 %v1328, 1.442695
    %v1338 = vpow.pop %v1337
    %v1339 = vmul.f32 %v1329, 1.442695
    %v1340 = vpow.pop %v1339
    %v1341 = vmul.f32 %v1330, 1.442695
    %v1342 = vpow.pop %v1341
    %v1343 = vmul.f32 %v1331, 1.442695
    %v1344 = vpow.pop %v1343
    %v1345 = vmul.f32 %v1332, 1.442695
    %v1346 = vpow.pop %v1345
    %v1347 = vmul.f32 %v1333, 1.442695
    %v1348 = vpow.pop %v1347
    %v1349 = vmul.f32 %v1334, 1.442695
    %v1350 = vpow.pop %v1349
    %v1351 = vsel %vm1302, %v1336, 0.0
    %1352 = vadd.xlane.f32.xlu0 %v1351
    %v1353 = vpop.xlane.xlu0 %1352
    %v1354 = vsel %vm1302, %v1338, 0.0
    %1355 = vadd.xlane.f32.xlu0 %v1354
    %v1356 = vpop.xlane.xlu0 %1355
    %v1357 = vsel %vm1302, %v1340, 0.0
    %1358 = vadd.xlane.f32.xlu0 %v1357
    %v1359 = vpop.xlane.xlu0 %1358
    %v1360 = vsel %vm1302, %v1342, 0.0
    %1361 = vadd.xlane.f32.xlu0 %v1360
    %v1362 = vpop.xlane.xlu0 %1361
    %v1363 = vsel %vm1302, %v1344, 0.0
    %1364 = vadd.xlane.f32.xlu0 %v1363
    %v1365 = vpop.xlane.xlu0 %1364
    %v1366 = vsel %vm1302, %v1346, 0.0
    %1367 = vadd.xlane.f32.xlu0 %v1366
    %v1368 = vpop.xlane.xlu0 %1367
    %v1369 = vsel %vm1302, %v1348, 0.0
    %1370 = vadd.xlane.f32.xlu0 %v1369
    %v1371 = vpop.xlane.xlu0 %1370
    %v1372 = vsel %vm1302, %v1350, 0.0
    %1373 = vadd.xlane.f32.xlu0 %v1372
    %v1374 = vpop.xlane.xlu0 %1373
    %v1375 = vlog2.pop %v1353
    %v1376 = vmul.f32 %v1375, 0.6931472
    %v1377 = vlog2.pop %v1356
    %v1378 = vmul.f32 %v1377, 0.6931472
    %v1379 = vlog2.pop %v1359
    %v1380 = vmul.f32 %v1379, 0.6931472
    %v1381 = vlog2.pop %v1362
    %v1382 = vmul.f32 %v1381, 0.6931472
    %v1383 = vlog2.pop %v1365
    %v1384 = vmul.f32 %v1383, 0.6931472
    %v1385 = vlog2.pop %v1368
    %v1386 = vmul.f32 %v1385, 0.6931472
    %v1387 = vlog2.pop %v1371
    %v1388 = vmul.f32 %v1387, 0.6931472
    %v1389 = vlog2.pop %v1374
    %v1390 = vmul.f32 %v1389, 0.6931472
    %v1391 = vsub.f32 %v1327, %v1376
    %v1392 = vsub.f32 %v1328, %v1378
    %v1393 = vsub.f32 %v1329, %v1380
    %v1394 = vsub.f32 %v1330, %v1382
    %v1395 = vsub.f32 %v1331, %v1384
    %v1396 = vsub.f32 %v1332, %v1386
    %v1397 = vsub.f32 %v1333, %v1388
    %v1398 = vsub.f32 %v1334, %v1390
    %1399 = vst.msk [vmem:[%s3] sm:$0xff] %vm1302, %v1391
    %1400 = vst.msk [vmem:[%s3 + $0x8] sm:$0xff] %vm1302, %v1392
    %1401 = vst.msk [vmem:[%s3 + $0x10] sm:$0xff] %vm1302, %v1393
    %1402 = vst.msk [vmem:[%s3 + $0x18] sm:$0xff] %vm1302, %v1394
    %1403 = vst.msk [vmem:[%s3 + $0x20] sm:$0xff] %vm1302, %v1395
    %1404 = vst.msk [vmem:[%s3 + $0x28] sm:$0xff] %vm1302, %v1396
    %1405 = vst.msk [vmem:[%s3 + $0x30] sm:$0xff] %vm1302, %v1397
    %1406 = vst.msk [vmem:[%s3 + $0x38] sm:$0xff] %vm1302, %v1398
    // Predicated region
    $region26: #{fwd.1} parent=1 // pred_check
      _
    $region27: #{fwd.1} parent=1 // pred_check_branch
      %1408 = sbr.rel (0) target = $region29
    $region28: #{fwd.1} parent=1 // pred_region
      _
    $region29: #{fwd.1} parent=1 // pred_fallthru
      _
    // Predicated region
    $region30: #{fwd.1} parent=1 // pred_check
      _
    $region31: #{fwd.1} parent=1 // pred_check_branch
      %1410 = sbr.rel (0) target = $region33
    $region32: #{fwd.1} parent=1 // pred_region
      _
    $region33: #{fwd.1} parent=1 // pred_fallthru
      _
    %1411 = vsyncpa [#allocation3], 1
    %1412 = vsyncpa [#allocation5], 1

</llo_original>
